<compile_context>
chip_gen: v7x
topology: tpu7x:2x2x1
jax: 0.10.0
libtpu: 0.0.40
codegen_flags: <defaults>
</compile_context>

<pallas_src>
import functools

import jax
import jax.numpy as jnp
from jax.experimental import pallas as pl
from jax.experimental.pallas import tpu as pltpu

EPS = 1e-5                      # nn.BatchNorm1d default eps
_HI = jax.lax.Precision.HIGHEST

# Fixed operand ordering for the kernel (after the activation x, before the output).
_PARAM_KEYS = ("wp", "bp", "hw", "hb", "hs", "ht", "wa", "ba",
               "wt0", "bt0", "wtr", "btr", "st", "tt")


# ---------------------------------------------------------------------------
# Shared math (packed-head layout).  Used by the Pallas kernel (on VMEM values)
# and, with in_kernel=False, as a pure-JAX reference for the packed/quantized
# parameterization.
# ---------------------------------------------------------------------------
def _fused_math(x, p, *, depth, in_kernel):
    f32 = jnp.float32
    wdt = p["wp"].dtype                     # weights dtype (bf16 or f32)

    def mm(a, w):                           # MXU dot, f32 accumulation
        return jnp.dot(a.astype(wdt), w, preferred_element_type=f32)

    # projection_layer: LazyLinear(F -> D), replicated into every head's lane slot -> (B, H*D)
    v = mm(x, p["wp"]) + p["bp"]

    # all heads at once: block-diagonal packed MLPStack
    # blocks: [in->hid no-res] + (depth-1) x [hid->hid residual] + [hid->out no-res]
    nb = depth + 1
    for blk in range(nb):
        y = jnp.maximum(mm(v, p["hw"][blk]) + p["hb"][blk], 0.0)     # Linear+BN(folded) -> ReLU
        if 1 <= blk <= nb - 2:                                        # middle blocks carry residual
            y = y + v
        v = y
    head_out = v * p["hs"] + p["ht"]        # MLPStack final BN (eval affine), per head slot

    # attention: same Linear(D->D) per head (block-diagonal), then nn.Softmax().
    # PyTorch implicit dim for a 3-D input is 0 == the BATCH axis; in the packed layout every lane
    # is a distinct (head, feature) pair, so a softmax over axis 0 is exactly equivalent.
    score = mm(head_out, p["wa"]) + p["ba"]
    m = jnp.max(score, axis=0, keepdims=True)
    e = jnp.exp(score - m)
    denom = jnp.sum(e, axis=0, keepdims=True)
    inv = pl.reciprocal(denom, approx=False) if in_kernel else 1.0 / denom
    weighted = (e * inv) * head_out         # packed (B, H*D) == torch flatten(1) layout

    # transform MLPStack: lazy first block (H*D -> D) + 2*depth blocks (D -> D) + final BN
    t = jnp.maximum(mm(weighted, p["wt0"]) + p["bt0"], 0.0)
    for i in range(2 * depth):
        t = jnp.maximum(mm(t, p["wtr"][i]) + p["btr"][i], 0.0)
    return t * p["st"] + p["tt"]            # (B, d_pad), lanes >= D are exact zeros


# ---------------------------------------------------------------------------
# Pallas kernel: whole forward pass in VMEM, single grid-less invocation.
# ---------------------------------------------------------------------------
def _attention_block_kernel(*refs, depth):
    x_ref, o_ref = refs[0], refs[-1]
    p = {k: r[...] for k, r in zip(_PARAM_KEYS, refs[1:-1])}
    o_ref[...] = _fused_math(x_ref[...], p, depth=depth, in_kernel=True).astype(o_ref.dtype)


# ---------------------------------------------------------------------------
# Per-call wrapper: reshape (free under jit) + single pallas_call + lane slice.
# ---------------------------------------------------------------------------
def attention_block_forward(data, prep, *, depth, d):
    b = data.shape[0]
    x = data.reshape(b, -1)        # torch: data.view(B, -1) for ndim >= 3
    d_pad = prep["wp"].shape[1]

    kernel = functools.partial(_attention_block_kernel, depth=depth)
    vmem = pltpu.MemorySpace.VMEM
    operands = (x,) + tuple(prep[k] for k in _PARAM_KEYS)

    out = pl.pallas_call(
        kernel,
        out_shape=jax.ShapeDtypeStruct((b, d_pad), jnp.float32),     # lane-dense store
        in_specs=[pl.BlockSpec(memory_space=vmem)] * len(operands),
        out_specs=pl.BlockSpec(memory_space=vmem),
    )(*operands)
    return out[:, :d]              # drop lane padding outside the kernel (cheap at this size)


# ---------------------------------------------------------------------------
# One-time parameter preparation: fold eval-mode BN into the Linears, transpose
# to (in, out), pack the heads block-diagonally into the 128-lane width and
# (optionally) cast weights to bf16.  Not in the per-call path.
# ---------------------------------------------------------------------------
def _bn_affine(bn):
    s = bn["g"] / jnp.sqrt(bn["v"] + EPS)
    t = bn["b"] - bn["m"] * s
    return s, t


def _fold_block(blk):
    s, t = _bn_affine(blk["bn"])
    w_f = blk["W"] * s[:, None]          # (out, in), PyTorch layout
    b_f = blk["b"] * s + t               # (out,)
    return w_f, b_f


def prepare_params(params, *, num_heads, depth, d, weights_dtype=jnp.bfloat16):
    H = num_heads
    d_pad = max(128, -(-(H * d) // 128) * 128)       # packed lane width (>= H*d, 128-aligned)
    f32 = jnp.float32

    def wcast(w):
        return w.astype(weights_dtype)

    prep = {}

    # projection (no BN): same (F, d) weight replicated into each head's lane slot.
    w_p, b_p = params["proj"]["W"], params["proj"]["b"]               # (d, F), (d,)
    f_in = w_p.shape[1]
    wp = jnp.zeros((f_in, d_pad), f32)
    bp = jnp.zeros((1, d_pad), f32)
    for h in range(H):
        wp = wp.at[:, h * d:(h + 1) * d].set(w_p.T)
        bp = bp.at[0, h * d:(h + 1) * d].set(b_p)
    prep["wp"], prep["bp"] = wcast(wp), bp

    # head MLP blocks, packed block-diagonally: one (d_pad, d_pad) weight per layer.
    nb = depth + 1
    hw = jnp.zeros((nb, d_pad, d_pad), f32)
    hb = jnp.zeros((nb, 1, d_pad), f32)
    hs = jnp.zeros((1, d_pad), f32)
    ht = jnp.zeros((1, d_pad), f32)
    for h, head in enumerate(params["heads"]):
        lo = h * d
        for i, blk in enumerate(head["blocks"]):
            w_f, b_f = _fold_block(blk)
            hw = hw.at[i, lo:lo + d, lo:lo + d].set(w_f.T)
            hb = hb.at[i, 0, lo:lo + d].set(b_f)
        s, t = _bn_affine(head["final_bn"])
        hs = hs.at[0, lo:lo + d].set(s)
        ht = ht.at[0, lo:lo + d].set(t)
    prep.update(hw=wcast(hw), hb=hb, hs=hs, ht=ht)

    # attention linear: the SAME (d, d) weight repeated on every diagonal block.
    wa = jnp.zeros((d_pad, d_pad), f32)
    ba = jnp.zeros((1, d_pad), f32)
    w_a, b_a = params["attn"]["W"], params["attn"]["b"]
    for h in range(H):
        lo = h * d
        wa = wa.at[lo:lo + d, lo:lo + d].set(w_a.T)
        ba = ba.at[0, lo:lo + d].set(b_a)
    prep["wa"], prep["ba"] = wcast(wa), ba

    # transform MLPStack: first (lazy) block maps the packed H*d lanes -> d (column-padded).
    tblocks = params["transform"]["blocks"]
    w0_f, b0_f = _fold_block(tblocks[0])                              # (d, H*d)
    wt0 = jnp.zeros((d_pad, d_pad), f32).at[:H * d, :d].set(w0_f.T)
    bt0 = jnp.zeros((1, d_pad), f32).at[0, :d].set(b0_f)
    prep["wt0"], prep["bt0"] = wcast(wt0), bt0

    n_rest = len(tblocks) - 1
    wtr = jnp.zeros((n_rest, d_pad, d_pad), f32)
    btr = jnp.zeros((n_rest, 1, d_pad), f32)
    for i, blk in enumerate(tblocks[1:]):
        w_f, b_f = _fold_block(blk)
        wtr = wtr.at[i, :d, :d].set(w_f.T)
        btr = btr.at[i, 0, :d].set(b_f)
    prep.update(wtr=wcast(wtr), btr=btr)

    s, t = _bn_affine(params["transform"]["final_bn"])
    prep["st"] = jnp.zeros((1, d_pad), f32).at[0, :d].set(s)
    prep["tt"] = jnp.zeros((1, d_pad), f32).at[0, :d].set(t)
    return prep


# ---------------------------------------------------------------------------
# Deterministic parameter construction (PyTorch layouts) + pure-JAX faithful reference.
# ---------------------------------------------------------------------------
def make_params(key, *, in_features, output_size, depth, num_heads):
    n_keys = 1 + num_heads * (2 * (depth + 1) + 1) + 1 + (2 * (2 * depth + 1) + 1)
    keys = iter(jax.random.split(key, n_keys))

    def linear(out_f, in_f):
        kw, kb = jax.random.split(next(keys))
        bound = 1.0 / (in_f ** 0.5)
        return {"W": jax.random.uniform(kw, (out_f, in_f), jnp.float32, -bound, bound),
                "b": jax.random.uniform(kb, (out_f,), jnp.float32, -bound, bound)}

    def bn(n):
        k1, k2, k3, k4 = jax.random.split(next(keys), 4)
        return {"g": jax.random.uniform(k1, (n,), jnp.float32, 0.8, 1.2),
                "b": 0.1 * jax.random.normal(k2, (n,), jnp.float32),
                "m": 0.1 * jax.random.normal(k3, (n,), jnp.float32),
                "v": jax.random.uniform(k4, (n,), jnp.float32, 0.5, 1.5)}

    def mlp_block(out_f, in_f):
        return {**linear(out_f, in_f), "bn": bn(out_f)}

    def mlp_stack(in_f, hidden, out_f, dpth):
        blocks = [mlp_block(hidden, in_f)]
        for _ in range(dpth - 1):
            blocks.append(mlp_block(hidden, hidden))
        blocks.append(mlp_block(out_f, hidden))
        return {"blocks": blocks, "final_bn": bn(out_f)}

    d = output_size
    return {"proj": linear(d, in_features),
            "heads": [mlp_stack(d, d, d, depth) for _ in range(num_heads)],
            "attn": linear(d, d),
            "transform": mlp_stack(num_heads * d, d, d, 2 * depth)}


def _bn_eval(x, bn):
    return (x - bn["m"]) / jnp.sqrt(bn["v"] + EPS) * bn["g"] + bn["b"]


def _mlp_block_ref(x, blk, residual):
    y = jnp.dot(x, blk["W"].T, precision=_HI) + blk["b"]
    y = jnp.maximum(_bn_eval(y, blk["bn"]), 0.0)
    return y + x if residual else y


def _mlp_stack_ref(x, stack, residual):
    n = len(stack["blocks"])
    for i, blk in enumerate(stack["blocks"]):
        x = _mlp_block_ref(x, blk, residual and (1 <= i <= n - 2))
    return _bn_eval(x, stack["final_bn"])


def reference_forward(data, params):
    b = data.shape[0]
    x = data.reshape(b, -1)
    pv = jnp.dot(x, params["proj"]["W"].T, precision=_HI) + params["proj"]["b"]
    outs = jnp.stack([_mlp_stack_ref(pv, h, True) for h in params["heads"]], axis=1)   # (B, H, D)
    scores = jnp.einsum("bhd,ed->bhe", outs, params["attn"]["W"], precision=_HI) + params["attn"]["b"]
    weights = jax.nn.softmax(scores, axis=0)     # torch nn.Softmax() implicit dim = 0 for 3-D input
    weighted = (weights * outs).reshape(b, -1)
    return _mlp_stack_ref(weighted, params["transform"], False)


# ---------------------------------------------------------------------------
if __name__ == "__main__":
    OUTPUT_SIZE = 32          # hidden = 32
    DEPTH = 2
    NUM_HEADS = 4
    B, C, S = 2, 4, 16        # data (2, 4, 16): ndim >= 3 -> flattened to (2, 64) in forward
    IN_FEATURES = C * S

    k_params, k_data = jax.random.split(jax.random.PRNGKey(0))
    params = make_params(k_params, in_features=IN_FEATURES, output_size=OUTPUT_SIZE,
                         depth=DEPTH, num_heads=NUM_HEADS)
    data = jax.random.normal(k_data, (B, C, S), dtype=jnp.float32)

    fwd = jax.jit(functools.partial(attention_block_forward, depth=DEPTH, d=OUTPUT_SIZE))

    # 1) f32-mode parity: packed kernel vs. the faithful (unpacked) PyTorch-semantics reference.
    prep_f32 = prepare_params(params, num_heads=NUM_HEADS, depth=DEPTH, d=OUTPUT_SIZE,
                              weights_dtype=jnp.float32)
    y_f32 = fwd(data, prep_f32)
    jax.block_until_ready(y_f32)
    y_ref = reference_forward(data, params)
    assert y_f32.shape == (B, OUTPUT_SIZE), y_f32.shape
    assert jnp.allclose(y_f32, y_ref, atol=1e-3, rtol=1e-3), float(jnp.max(jnp.abs(y_f32 - y_ref)))

    # 2) bf16-weight mode (the performance default): kernel vs. the identical packed math in
    #    pure JAX (same bf16-quantized weights, f32 accumulation).
    prep_bf16 = prepare_params(params, num_heads=NUM_HEADS, depth=DEPTH, d=OUTPUT_SIZE,
                               weights_dtype=jnp.bfloat16)
    y_bf16 = fwd(data, prep_bf16)
    jax.block_until_ready(y_bf16)
    y_packed_ref = _fused_math(data.reshape(B, -1), prep_bf16, depth=DEPTH,
                               in_kernel=False)[:, :OUTPUT_SIZE]
    assert y_bf16.shape == (B, OUTPUT_SIZE), y_bf16.shape
    assert jnp.allclose(y_bf16, y_packed_ref, atol=2e-3, rtol=2e-3), \
        float(jnp.max(jnp.abs(y_bf16 - y_packed_ref)))

    print("KERNEL_OK")
</pallas_src>

<mosaic_0001>
module attributes {stable_mosaic.version = 11 : i64} {
  func.func @_attention_block_kernel(%arg0: memref<2x64xf32, #tpu.memory_space<vmem>>, %arg1: memref<64x128xf32, #tpu.memory_space<vmem>>, %arg2: memref<1x128xf32, #tpu.memory_space<vmem>>, %arg3: memref<3x128x128xf32, #tpu.memory_space<vmem>>, %arg4: memref<3x1x128xf32, #tpu.memory_space<vmem>>, %arg5: memref<1x128xf32, #tpu.memory_space<vmem>>, %arg6: memref<1x128xf32, #tpu.memory_space<vmem>>, %arg7: memref<128x128xf32, #tpu.memory_space<vmem>>, %arg8: memref<1x128xf32, #tpu.memory_space<vmem>>, %arg9: memref<128x128xf32, #tpu.memory_space<vmem>>, %arg10: memref<1x128xf32, #tpu.memory_space<vmem>>, %arg11: memref<4x128x128xf32, #tpu.memory_space<vmem>>, %arg12: memref<4x1x128xf32, #tpu.memory_space<vmem>>, %arg13: memref<1x128xf32, #tpu.memory_space<vmem>>, %arg14: memref<1x128xf32, #tpu.memory_space<vmem>>, %arg15: memref<2x128xf32, #tpu.memory_space<vmem>>) attributes {dimension_semantics = [], scalar_prefetch = 0 : i64, scratch_operands = 0 : i64, tpu.core_type = #tpu.core_type<tc>} {
    %c0 = arith.constant 0 : index
    %c0_0 = arith.constant 0 : index
    %0 = vector.load %arg1[%c0, %c0_0] : memref<64x128xf32, #tpu.memory_space<vmem>>, vector<64x128xf32>
    %c0_1 = arith.constant 0 : index
    %c0_2 = arith.constant 0 : index
    %1 = vector.load %arg2[%c0_1, %c0_2] : memref<1x128xf32, #tpu.memory_space<vmem>>, vector<1x128xf32>
    %c0_3 = arith.constant 0 : index
    %c0_4 = arith.constant 0 : index
    %c0_5 = arith.constant 0 : index
    %2 = vector.load %arg3[%c0_3, %c0_4, %c0_5] : memref<3x128x128xf32, #tpu.memory_space<vmem>>, vector<3x128x128xf32>
    %c0_6 = arith.constant 0 : index
    %c0_7 = arith.constant 0 : index
    %c0_8 = arith.constant 0 : index
    %3 = vector.load %arg4[%c0_6, %c0_7, %c0_8] : memref<3x1x128xf32, #tpu.memory_space<vmem>>, vector<3x1x128xf32>
    %c0_9 = arith.constant 0 : index
    %c0_10 = arith.constant 0 : index
    %4 = vector.load %arg5[%c0_9, %c0_10] : memref<1x128xf32, #tpu.memory_space<vmem>>, vector<1x128xf32>
    %c0_11 = arith.constant 0 : index
    %c0_12 = arith.constant 0 : index
    %5 = vector.load %arg6[%c0_11, %c0_12] : memref<1x128xf32, #tpu.memory_space<vmem>>, vector<1x128xf32>
    %c0_13 = arith.constant 0 : index
    %c0_14 = arith.constant 0 : index
    %6 = vector.load %arg7[%c0_13, %c0_14] : memref<128x128xf32, #tpu.memory_space<vmem>>, vector<128x128xf32>
    %c0_15 = arith.constant 0 : index
    %c0_16 = arith.constant 0 : index
    %7 = vector.load %arg8[%c0_15, %c0_16] : memref<1x128xf32, #tpu.memory_space<vmem>>, vector<1x128xf32>
    %c0_17 = arith.constant 0 : index
    %c0_18 = arith.constant 0 : index
    %8 = vector.load %arg9[%c0_17, %c0_18] : memref<128x128xf32, #tpu.memory_space<vmem>>, vector<128x128xf32>
    %c0_19 = arith.constant 0 : index
    %c0_20 = arith.constant 0 : index
    %9 = vector.load %arg10[%c0_19, %c0_20] : memref<1x128xf32, #tpu.memory_space<vmem>>, vector<1x128xf32>
    %c0_21 = arith.constant 0 : index
    %c0_22 = arith.constant 0 : index
    %c0_23 = arith.constant 0 : index
    %10 = vector.load %arg11[%c0_21, %c0_22, %c0_23] : memref<4x128x128xf32, #tpu.memory_space<vmem>>, vector<4x128x128xf32>
    %c0_24 = arith.constant 0 : index
    %c0_25 = arith.constant 0 : index
    %c0_26 = arith.constant 0 : index
    %11 = vector.load %arg12[%c0_24, %c0_25, %c0_26] : memref<4x1x128xf32, #tpu.memory_space<vmem>>, vector<4x1x128xf32>
    %c0_27 = arith.constant 0 : index
    %c0_28 = arith.constant 0 : index
    %12 = vector.load %arg13[%c0_27, %c0_28] : memref<1x128xf32, #tpu.memory_space<vmem>>, vector<1x128xf32>
    %c0_29 = arith.constant 0 : index
    %c0_30 = arith.constant 0 : index
    %13 = vector.load %arg14[%c0_29, %c0_30] : memref<1x128xf32, #tpu.memory_space<vmem>>, vector<1x128xf32>
    %c0_31 = arith.constant 0 : index
    %c0_32 = arith.constant 0 : index
    %14 = vector.load %arg0[%c0_31, %c0_32] : memref<2x64xf32, #tpu.memory_space<vmem>>, vector<2x64xf32>
    %cst = arith.constant dense<0.000000e+00> : vector<2x128xf32>
    %15 = tpu.matmul %14, %0, %cst {dimension_numbers = #tpu.dot_dimension_numbers<[1], [0], [0], [1], [0, 0, 1, 1], [], []>} : vector<2x64xf32>, vector<64x128xf32>, vector<2x128xf32> -> vector<2x128xf32>
    %16 = vector.broadcast %1 : vector<1x128xf32> to vector<2x128xf32>
    %17 = arith.addf %15, %16 : vector<2x128xf32>
    %18 = vector.extract_strided_slice %2 {offsets = [0, 0, 0], sizes = [1, 128, 128], strides = [1, 1, 1]} : vector<3x128x128xf32> to vector<1x128x128xf32>
    %19 = vector.shape_cast %18 : vector<1x128x128xf32> to vector<128x128xf32>
    %cst_33 = arith.constant dense<0.000000e+00> : vector<2x128xf32>
    %20 = tpu.matmul %17, %19, %cst_33 {dimension_numbers = #tpu.dot_dimension_numbers<[1], [0], [0], [1], [0, 0, 1, 1], [], []>} : vector<2x128xf32>, vector<128x128xf32>, vector<2x128xf32> -> vector<2x128xf32>
    %21 = vector.extract_strided_slice %3 {offsets = [0, 0, 0], sizes = [1, 1, 128], strides = [1, 1, 1]} : vector<3x1x128xf32> to vector<1x1x128xf32>
    %22 = vector.shape_cast %21 : vector<1x1x128xf32> to vector<1x128xf32>
    %23 = vector.broadcast %22 : vector<1x128xf32> to vector<2x128xf32>
    %24 = arith.addf %20, %23 : vector<2x128xf32>
    %cst_34 = arith.constant 0.000000e+00 : f32
    %25 = vector.broadcast %cst_34 : f32 to vector<2x128xf32>
    %26 = arith.maximumf %24, %25 : vector<2x128xf32>
    %27 = vector.extract_strided_slice %2 {offsets = [1, 0, 0], sizes = [1, 128, 128], strides = [1, 1, 1]} : vector<3x128x128xf32> to vector<1x128x128xf32>
    %28 = vector.shape_cast %27 : vector<1x128x128xf32> to vector<128x128xf32>
    %cst_35 = arith.constant dense<0.000000e+00> : vector<2x128xf32>
    %29 = tpu.matmul %26, %28, %cst_35 {dimension_numbers = #tpu.dot_dimension_numbers<[1], [0], [0], [1], [0, 0, 1, 1], [], []>} : vector<2x128xf32>, vector<128x128xf32>, vector<2x128xf32> -> vector<2x128xf32>
    %30 = vector.extract_strided_slice %3 {offsets = [1, 0, 0], sizes = [1, 1, 128], strides = [1, 1, 1]} : vector<3x1x128xf32> to vector<1x1x128xf32>
    %31 = vector.shape_cast %30 : vector<1x1x128xf32> to vector<1x128xf32>
    %32 = vector.broadcast %31 : vector<1x128xf32> to vector<2x128xf32>
    %33 = arith.addf %29, %32 : vector<2x128xf32>
    %cst_36 = arith.constant 0.000000e+00 : f32
    %34 = vector.broadcast %cst_36 : f32 to vector<2x128xf32>
    %35 = arith.maximumf %33, %34 : vector<2x128xf32>
    %36 = arith.addf %35, %26 : vector<2x128xf32>
    %37 = vector.extract_strided_slice %2 {offsets = [2, 0, 0], sizes = [1, 128, 128], strides = [1, 1, 1]} : vector<3x128x128xf32> to vector<1x128x128xf32>
    %38 = vector.shape_cast %37 : vector<1x128x128xf32> to vector<128x128xf32>
    %cst_37 = arith.constant dense<0.000000e+00> : vector<2x128xf32>
    %39 = tpu.matmul %36, %38, %cst_37 {dimension_numbers = #tpu.dot_dimension_numbers<[1], [0], [0], [1], [0, 0, 1, 1], [], []>} : vector<2x128xf32>, vector<128x128xf32>, vector<2x128xf32> -> vector<2x128xf32>
    %40 = vector.extract_strided_slice %3 {offsets = [2, 0, 0], sizes = [1, 1, 128], strides = [1, 1, 1]} : vector<3x1x128xf32> to vector<1x1x128xf32>
    %41 = vector.shape_cast %40 : vector<1x1x128xf32> to vector<1x128xf32>
    %42 = vector.broadcast %41 : vector<1x128xf32> to vector<2x128xf32>
    %43 = arith.addf %39, %42 : vector<2x128xf32>
    %cst_38 = arith.constant 0.000000e+00 : f32
    %44 = vector.broadcast %cst_38 : f32 to vector<2x128xf32>
    %45 = arith.maximumf %43, %44 : vector<2x128xf32>
    %46 = vector.broadcast %4 : vector<1x128xf32> to vector<2x128xf32>
    %47 = arith.mulf %45, %46 : vector<2x128xf32>
    %48 = vector.broadcast %5 : vector<1x128xf32> to vector<2x128xf32>
    %49 = arith.addf %47, %48 : vector<2x128xf32>
    %cst_39 = arith.constant dense<0.000000e+00> : vector<2x128xf32>
    %50 = tpu.matmul %49, %6, %cst_39 {dimension_numbers = #tpu.dot_dimension_numbers<[1], [0], [0], [1], [0, 0, 1, 1], [], []>} : vector<2x128xf32>, vector<128x128xf32>, vector<2x128xf32> -> vector<2x128xf32>
    %51 = vector.broadcast %7 : vector<1x128xf32> to vector<2x128xf32>
    %52 = arith.addf %50, %51 : vector<2x128xf32>
    %cst_40 = arith.constant dense<0xFF800000> : vector<128xf32>
    %53 = vector.multi_reduction <maximumf>, %52, %cst_40 [0] : vector<2x128xf32> to vector<128xf32>
    %54 = vector.shape_cast %53 : vector<128xf32> to vector<1x128xf32>
    %55 = vector.broadcast %54 : vector<1x128xf32> to vector<2x128xf32>
    %56 = arith.subf %52, %55 : vector<2x128xf32>
    %57 = math.exp %56 : vector<2x128xf32>
    %cst_41 = arith.constant dense<0.000000e+00> : vector<128xf32>
    %58 = vector.multi_reduction <add>, %57, %cst_41 [0] : vector<2x128xf32> to vector<128xf32>
    %59 = vector.shape_cast %58 : vector<128xf32> to vector<1x128xf32>
    %60 = tpu.reciprocal %59 : vector<1x128xf32> -> vector<1x128xf32>
    %61 = vector.broadcast %60 : vector<1x128xf32> to vector<2x128xf32>
    %62 = arith.mulf %57, %61 : vector<2x128xf32>
    %63 = arith.mulf %62, %49 : vector<2x128xf32>
    %cst_42 = arith.constant dense<0.000000e+00> : vector<2x128xf32>
    %64 = tpu.matmul %63, %8, %cst_42 {dimension_numbers = #tpu.dot_dimension_numbers<[1], [0], [0], [1], [0, 0, 1, 1], [], []>} : vector<2x128xf32>, vector<128x128xf32>, vector<2x128xf32> -> vector<2x128xf32>
    %65 = vector.broadcast %9 : vector<1x128xf32> to vector<2x128xf32>
    %66 = arith.addf %64, %65 : vector<2x128xf32>
    %cst_43 = arith.constant 0.000000e+00 : f32
    %67 = vector.broadcast %cst_43 : f32 to vector<2x128xf32>
    %68 = arith.maximumf %66, %67 : vector<2x128xf32>
    %69 = vector.extract_strided_slice %10 {offsets = [0, 0, 0], sizes = [1, 128, 128], strides = [1, 1, 1]} : vector<4x128x128xf32> to vector<1x128x128xf32>
    %70 = vector.shape_cast %69 : vector<1x128x128xf32> to vector<128x128xf32>
    %cst_44 = arith.constant dense<0.000000e+00> : vector<2x128xf32>
    %71 = tpu.matmul %68, %70, %cst_44 {dimension_numbers = #tpu.dot_dimension_numbers<[1], [0], [0], [1], [0, 0, 1, 1], [], []>} : vector<2x128xf32>, vector<128x128xf32>, vector<2x128xf32> -> vector<2x128xf32>
    %72 = vector.extract_strided_slice %11 {offsets = [0, 0, 0], sizes = [1, 1, 128], strides = [1, 1, 1]} : vector<4x1x128xf32> to vector<1x1x128xf32>
    %73 = vector.shape_cast %72 : vector<1x1x128xf32> to vector<1x128xf32>
    %74 = vector.broadcast %73 : vector<1x128xf32> to vector<2x128xf32>
    %75 = arith.addf %71, %74 : vector<2x128xf32>
    %cst_45 = arith.constant 0.000000e+00 : f32
    %76 = vector.broadcast %cst_45 : f32 to vector<2x128xf32>
    %77 = arith.maximumf %75, %76 : vector<2x128xf32>
    %78 = vector.extract_strided_slice %10 {offsets = [1, 0, 0], sizes = [1, 128, 128], strides = [1, 1, 1]} : vector<4x128x128xf32> to vector<1x128x128xf32>
    %79 = vector.shape_cast %78 : vector<1x128x128xf32> to vector<128x128xf32>
    %cst_46 = arith.constant dense<0.000000e+00> : vector<2x128xf32>
    %80 = tpu.matmul %77, %79, %cst_46 {dimension_numbers = #tpu.dot_dimension_numbers<[1], [0], [0], [1], [0, 0, 1, 1], [], []>} : vector<2x128xf32>, vector<128x128xf32>, vector<2x128xf32> -> vector<2x128xf32>
    %81 = vector.extract_strided_slice %11 {offsets = [1, 0, 0], sizes = [1, 1, 128], strides = [1, 1, 1]} : vector<4x1x128xf32> to vector<1x1x128xf32>
    %82 = vector.shape_cast %81 : vector<1x1x128xf32> to vector<1x128xf32>
    %83 = vector.broadcast %82 : vector<1x128xf32> to vector<2x128xf32>
    %84 = arith.addf %80, %83 : vector<2x128xf32>
    %cst_47 = arith.constant 0.000000e+00 : f32
    %85 = vector.broadcast %cst_47 : f32 to vector<2x128xf32>
    %86 = arith.maximumf %84, %85 : vector<2x128xf32>
    %87 = vector.extract_strided_slice %10 {offsets = [2, 0, 0], sizes = [1, 128, 128], strides = [1, 1, 1]} : vector<4x128x128xf32> to vector<1x128x128xf32>
    %88 = vector.shape_cast %87 : vector<1x128x128xf32> to vector<128x128xf32>
    %cst_48 = arith.constant dense<0.000000e+00> : vector<2x128xf32>
    %89 = tpu.matmul %86, %88, %cst_48 {dimension_numbers = #tpu.dot_dimension_numbers<[1], [0], [0], [1], [0, 0, 1, 1], [], []>} : vector<2x128xf32>, vector<128x128xf32>, vector<2x128xf32> -> vector<2x128xf32>
    %90 = vector.extract_strided_slice %11 {offsets = [2, 0, 0], sizes = [1, 1, 128], strides = [1, 1, 1]} : vector<4x1x128xf32> to vector<1x1x128xf32>
    %91 = vector.shape_cast %90 : vector<1x1x128xf32> to vector<1x128xf32>
    %92 = vector.broadcast %91 : vector<1x128xf32> to vector<2x128xf32>
    %93 = arith.addf %89, %92 : vector<2x128xf32>
    %cst_49 = arith.constant 0.000000e+00 : f32
    %94 = vector.broadcast %cst_49 : f32 to vector<2x128xf32>
    %95 = arith.maximumf %93, %94 : vector<2x128xf32>
    %96 = vector.extract_strided_slice %10 {offsets = [3, 0, 0], sizes = [1, 128, 128], strides = [1, 1, 1]} : vector<4x128x128xf32> to vector<1x128x128xf32>
    %97 = vector.shape_cast %96 : vector<1x128x128xf32> to vector<128x128xf32>
    %cst_50 = arith.constant dense<0.000000e+00> : vector<2x128xf32>
    %98 = tpu.matmul %95, %97, %cst_50 {dimension_numbers = #tpu.dot_dimension_numbers<[1], [0], [0], [1], [0, 0, 1, 1], [], []>} : vector<2x128xf32>, vector<128x128xf32>, vector<2x128xf32> -> vector<2x128xf32>
    %99 = vector.extract_strided_slice %11 {offsets = [3, 0, 0], sizes = [1, 1, 128], strides = [1, 1, 1]} : vector<4x1x128xf32> to vector<1x1x128xf32>
    %100 = vector.shape_cast %99 : vector<1x1x128xf32> to vector<1x128xf32>
    %101 = vector.broadcast %100 : vector<1x128xf32> to vector<2x128xf32>
    %102 = arith.addf %98, %101 : vector<2x128xf32>
    %cst_51 = arith.constant 0.000000e+00 : f32
    %103 = vector.broadcast %cst_51 : f32 to vector<2x128xf32>
    %104 = arith.maximumf %102, %103 : vector<2x128xf32>
    %105 = vector.broadcast %12 : vector<1x128xf32> to vector<2x128xf32>
    %106 = arith.mulf %104, %105 : vector<2x128xf32>
    %107 = vector.broadcast %13 : vector<1x128xf32> to vector<2x128xf32>
    %108 = arith.addf %106, %107 : vector<2x128xf32>
    %c0_52 = arith.constant 0 : index
    %c0_53 = arith.constant 0 : index
    %109 = vector.load %arg15[%c0_52, %c0_53] : memref<2x128xf32, #tpu.memory_space<vmem>>, vector<2x128xf32>
    tpu.vector_store %arg15[%c0_52, %c0_53], %108 {strides = array<i32>} : memref<2x128xf32, #tpu.memory_space<vmem>>, vector<2x128xf32>,
    return
  }
}

</mosaic_0001>

<llo_original>
// kernel: attention_block_forward.1
$region0: #{attention_block_forward.1}
  #allocation0 [shape = 'u32[]', space=smem, size = 0x4, offset = 0x4, fixed_abs, tag = 'smem constant byte address 0x4 - core index']
  #allocation1 [shape = 'u32[144,128]{1,0:T(1,128)}', space=vmem, size = 0x12000, scoped, tag = 'internal scratch']
  %s0 = inlined_call_operand.vmem [shape: f32[2,64], index: 0, kind: input, shape index: {}]
  %s1 = inlined_call_operand.hbm [shape: f32[64,128], index: 1, kind: input, shape index: {}]
  %s2 = inlined_call_operand.vmem [shape: f32[1,128], index: 2, kind: input, shape index: {}]
  %s3 = inlined_call_operand.hbm [shape: f32[3,128,128], index: 3, kind: input, shape index: {}]
  %s4 = inlined_call_operand.vmem [shape: f32[3,1,128], index: 4, kind: input, shape index: {}]
  %s5 = inlined_call_operand.vmem [shape: f32[1,128], index: 5, kind: input, shape index: {}]
  %s6 = inlined_call_operand.vmem [shape: f32[1,128], index: 6, kind: input, shape index: {}]
  %s7 = inlined_call_operand.hbm [shape: f32[128,128], index: 7, kind: input, shape index: {}]
  %s8 = inlined_call_operand.vmem [shape: f32[1,128], index: 8, kind: input, shape index: {}]
  %s9 = inlined_call_operand.hbm [shape: f32[128,128], index: 9, kind: input, shape index: {}]
  %s10 = inlined_call_operand.vmem [shape: f32[1,128], index: 10, kind: input, shape index: {}]
  %s11 = inlined_call_operand.hbm [shape: f32[4,128,128], index: 11, kind: input, shape index: {}]
  %s12 = inlined_call_operand.vmem [shape: f32[4,1,128], index: 12, kind: input, shape index: {}]
  %s13 = inlined_call_operand.vmem [shape: f32[1,128], index: 13, kind: input, shape index: {}]
  %s14 = inlined_call_operand.vmem [shape: f32[1,128], index: 14, kind: input, shape index: {}]
  %s15 = inlined_call_operand.hbm [shape: f32[2,128], index: 15, kind: output, shape index: {}]
  %s16 = sld [smem:[#allocation0]]
  $region90: #{attention_block_forward.1} parent=0
    _
  %s18 = ssub.s32 1, %s16
  %s19 = scalar_select 0, %s18, %s16
  $region1: #{attention_block_forward.1} parent=0
    #allocation2 [shape = 'u8[32768]{0}', space=vmem, size = 0x8000, scoped, tag = 'input window, operand 1, single buffered']
    #allocation3 [shape = 's32[1]{0}', space=sflag, size = 0x4, scoped, tag = 'scoped memory for attention_block_forward.1']
    #allocation4 [shape = 's32[1]{0}', space=sflag, size = 0x4, scoped, tag = 'scoped memory for attention_block_forward.1']
    #allocation5 [shape = 'u8[196608]{0}', space=vmem, size = 0x30000, scoped, tag = 'input window, operand 3, single buffered']
    #allocation6 [shape = 's32[1]{0}', space=sflag, size = 0x4, scoped, tag = 'scoped memory for attention_block_forward.1']
    #allocation7 [shape = 'u8[65536]{0}', space=vmem, size = 0x10000, scoped, tag = 'input window, operand 7, single buffered']
    #allocation8 [shape = 'u8[65536]{0}', space=vmem, size = 0x10000, scoped, tag = 'input window, operand 9, single buffered']
    #allocation9 [shape = 's32[1]{0}', space=sflag, size = 0x4, scoped, tag = 'scoped memory for attention_block_forward.1']
    #allocation10 [shape = 'u8[262144]{0}', space=vmem, size = 0x40000, scoped, tag = 'input window, operand 11, single buffered']
    #allocation11 [shape = 'u8[1024]{0}', space=vmem, size = 0x400, scoped, tag = 'output window, operand 0, single buffered']
    %20 = vsyncpa [#allocation3], 0
    %21 = vsyncpa [#allocation6], 0
    %22 = vsyncpa [#allocation9], 0
    %23 = vsyncpa [#allocation4], 0
    // Predicated region
    $region2: #{attention_block_forward.1} parent=1 // pred_check
      _
    $region3: #{attention_block_forward.1} parent=1 // pred_check_branch
      %25 = sbr.rel (0) target = $region5
    $region4: #{attention_block_forward.1} parent=1 // pred_region
      _
    $region5: #{attention_block_forward.1} parent=1 // pred_fallthru
      _
    // Predicated region
    $region6: #{attention_block_forward.1} parent=1 // pred_check
      _
    $region7: #{attention_block_forward.1} parent=1 // pred_check_branch
      %27 = sbr.rel (0) target = $region9
    $region8: #{attention_block_forward.1} parent=1 // pred_region
      %s29 = ssub.s32 1024, 1024
      %30 = vsyncadd [#allocation3], %s29
      %s31 = sshll.u32 [#allocation2], 4
      %s32 = int_to_ptr.vmem [resolvable:$true] %s31
      %37 = dma.hbm_to_vmem [thread:$0]  %s1, 1024, %s32, [#allocation3], 128, 128, 8
    $region9: #{attention_block_forward.1} parent=1 // pred_fallthru
      _
    // Predicated region
    $region10: #{attention_block_forward.1} parent=1 // pred_check
      _
    $region11: #{attention_block_forward.1} parent=1 // pred_check_branch
      %39 = sbr.rel (0) target = $region13
    $region12: #{attention_block_forward.1} parent=1 // pred_region
      _
    $region13: #{attention_block_forward.1} parent=1 // pred_fallthru
      _
    // Predicated region
    $region14: #{attention_block_forward.1} parent=1 // pred_check
      _
    $region15: #{attention_block_forward.1} parent=1 // pred_check_branch
      %41 = sbr.rel (0) target = $region17
    $region16: #{attention_block_forward.1} parent=1 // pred_region
      %s43 = ssub.s32 6144, 6144
      %44 = vsyncadd [#allocation6], %s43
      %s45 = sshll.u32 [#allocation5], 4
      %s46 = int_to_ptr.vmem [resolvable:$true] %s45
      %51 = dma.hbm_to_vmem [thread:$0]  %s3, 6144, %s46, [#allocation6], 128, 128, 8
    $region17: #{attention_block_forward.1} parent=1 // pred_fallthru
      _
    // Predicated region
    $region18: #{attention_block_forward.1} parent=1 // pred_check
      _
    $region19: #{attention_block_forward.1} parent=1 // pred_check_branch
      %53 = sbr.rel (0) target = $region21
    $region20: #{attention_block_forward.1} parent=1 // pred_region
      _
    $region21: #{attention_block_forward.1} parent=1 // pred_fallthru
      _
    // Predicated region
    $region22: #{attention_block_forward.1} parent=1 // pred_check
      _
    $region23: #{attention_block_forward.1} parent=1 // pred_check_branch
      %55 = sbr.rel (0) target = $region25
    $region24: #{attention_block_forward.1} parent=1 // pred_region
      _
    $region25: #{attention_block_forward.1} parent=1 // pred_fallthru
      _
    // Predicated region
    $region26: #{attention_block_forward.1} parent=1 // pred_check
      _
    $region27: #{attention_block_forward.1} parent=1 // pred_check_branch
      %57 = sbr.rel (0) target = $region29
    $region28: #{attention_block_forward.1} parent=1 // pred_region
      _
    $region29: #{attention_block_forward.1} parent=1 // pred_fallthru
      _
    // Predicated region
    $region30: #{attention_block_forward.1} parent=1 // pred_check
      _
    $region31: #{attention_block_forward.1} parent=1 // pred_check_branch
      %59 = sbr.rel (0) target = $region33
    $region32: #{attention_block_forward.1} parent=1 // pred_region
      %s61 = ssub.s32 2048, 2048
      %62 = vsyncadd [#allocation6], %s61
      %s63 = sshll.u32 [#allocation7], 4
      %s64 = int_to_ptr.vmem [resolvable:$true] %s63
      %69 = dma.hbm_to_vmem [thread:$0]  %s7, 2048, %s64, [#allocation6], 128, 128, 8
    $region33: #{attention_block_forward.1} parent=1 // pred_fallthru
      _
    // Predicated region
    $region34: #{attention_block_forward.1} parent=1 // pred_check
      _
    $region35: #{attention_block_forward.1} parent=1 // pred_check_branch
      %71 = sbr.rel (0) target = $region37
    $region36: #{attention_block_forward.1} parent=1 // pred_region
      _
    $region37: #{attention_block_forward.1} parent=1 // pred_fallthru
      _
    // Predicated region
    $region38: #{attention_block_forward.1} parent=1 // pred_check
      _
    $region39: #{attention_block_forward.1} parent=1 // pred_check_branch
      %73 = sbr.rel (0) target = $region41
    $region40: #{attention_block_forward.1} parent=1 // pred_region
      %s75 = ssub.s32 2048, 2048
      %76 = vsyncadd [#allocation9], %s75
      %s77 = sshll.u32 [#allocation8], 4
      %s78 = int_to_ptr.vmem [resolvable:$true] %s77
      %83 = dma.hbm_to_vmem [thread:$0]  %s9, 2048, %s78, [#allocation9], 128, 128, 8
    $region41: #{attention_block_forward.1} parent=1 // pred_fallthru
      _
    // Predicated region
    $region42: #{attention_block_forward.1} parent=1 // pred_check
      _
    $region43: #{attention_block_forward.1} parent=1 // pred_check_branch
      %85 = sbr.rel (0) target = $region45
    $region44: #{attention_block_forward.1} parent=1 // pred_region
      _
    $region45: #{attention_block_forward.1} parent=1 // pred_fallthru
      _
    // Predicated region
    $region46: #{attention_block_forward.1} parent=1 // pred_check
      _
    $region47: #{attention_block_forward.1} parent=1 // pred_check_branch
      %87 = sbr.rel (0) target = $region49
    $region48: #{attention_block_forward.1} parent=1 // pred_region
      %s89 = ssub.s32 8192, 8192
      %90 = vsyncadd [#allocation9], %s89
      %s91 = sshll.u32 [#allocation10], 4
      %s92 = int_to_ptr.vmem [resolvable:$true] %s91
      %97 = dma.hbm_to_vmem [thread:$0]  %s11, 8192, %s92, [#allocation9], 128, 128, 8
    $region49: #{attention_block_forward.1} parent=1 // pred_fallthru
      _
    // Predicated region
    $region50: #{attention_block_forward.1} parent=1 // pred_check
      _
    $region51: #{attention_block_forward.1} parent=1 // pred_check_branch
      %99 = sbr.rel (0) target = $region53
    $region52: #{attention_block_forward.1} parent=1 // pred_region
      _
    $region53: #{attention_block_forward.1} parent=1 // pred_fallthru
      _
    // Predicated region
    $region54: #{attention_block_forward.1} parent=1 // pred_check
      _
    $region55: #{attention_block_forward.1} parent=1 // pred_check_branch
      %101 = sbr.rel (0) target = $region57
    $region56: #{attention_block_forward.1} parent=1 // pred_region
      _
    $region57: #{attention_block_forward.1} parent=1 // pred_fallthru
      _
    // Predicated region
    $region58: #{attention_block_forward.1} parent=1 // pred_check
      _
    $region59: #{attention_block_forward.1} parent=1 // pred_check_branch
      %103 = sbr.rel (0) target = $region61
    $region60: #{attention_block_forward.1} parent=1 // pred_region
      _
    $region61: #{attention_block_forward.1} parent=1 // pred_fallthru
      _
    // Predicated region
    $region62: #{attention_block_forward.1} parent=1 // pred_check
      _
    $region63: #{attention_block_forward.1} parent=1 // pred_check_branch
      %105 = sbr.rel (0) target = $region65
    $region64: #{attention_block_forward.1} parent=1 // pred_region
      %106 = dma.done [#allocation3], 1024
    $region65: #{attention_block_forward.1} parent=1 // pred_fallthru
      _
    // Predicated region
    $region66: #{attention_block_forward.1} parent=1 // pred_check
      _
    $region67: #{attention_block_forward.1} parent=1 // pred_check_branch
      %108 = sbr.rel (0) target = $region69
    $region68: #{attention_block_forward.1} parent=1 // pred_region
      %109 = dma.done [#allocation6], 6144
    $region69: #{attention_block_forward.1} parent=1 // pred_fallthru
      _
    // Predicated region
    $region70: #{attention_block_forward.1} parent=1 // pred_check
      _
    $region71: #{attention_block_forward.1} parent=1 // pred_check_branch
      %111 = sbr.rel (0) target = $region73
    $region72: #{attention_block_forward.1} parent=1 // pred_region
      %112 = dma.done [#allocation6], 2048
    $region73: #{attention_block_forward.1} parent=1 // pred_fallthru
      _
    // Predicated region
    $region74: #{attention_block_forward.1} parent=1 // pred_check
      _
    $region75: #{attention_block_forward.1} parent=1 // pred_check_branch
      %114 = sbr.rel (0) target = $region77
    $region76: #{attention_block_forward.1} parent=1 // pred_region
      %115 = dma.done [#allocation9], 2048
    $region77: #{attention_block_forward.1} parent=1 // pred_fallthru
      _
    // Predicated region
    $region78: #{attention_block_forward.1} parent=1 // pred_check
      _
    $region79: #{attention_block_forward.1} parent=1 // pred_check_branch
      %117 = sbr.rel (0) target = $region81
    $region80: #{attention_block_forward.1} parent=1 // pred_region
      %118 = dma.done [#allocation9], 8192
    $region81: #{attention_block_forward.1} parent=1 // pred_fallthru
      _
    %v119 = vld [vmem:[#allocation2] sm:$0xff]
    %v120 = vld [vmem:[#allocation2 + $0x8] sm:$0xff]
    %v121 = vld [vmem:[#allocation2 + $0x10] sm:$0xff]
    %v122 = vld [vmem:[#allocation2 + $0x18] sm:$0xff]
    %v123 = vld [vmem:[#allocation2 + $0x20] sm:$0xff]
    %v124 = vld [vmem:[#allocation2 + $0x28] sm:$0xff]
    %v125 = vld [vmem:[#allocation2 + $0x30] sm:$0xff]
    %v126 = vld [vmem:[#allocation2 + $0x38] sm:$0xff]
    %v127 = vld [vmem:[%s2] sm:$0x1]
    %v128 = vld [vmem:[#allocation5] sm:$0xff]
    %v129 = vld [vmem:[#allocation5 + $0x8] sm:$0xff]
    %v130 = vld [vmem:[#allocation5 + $0x10] sm:$0xff]
    %v131 = vld [vmem:[#allocation5 + $0x18] sm:$0xff]
    %v132 = vld [vmem:[#allocation5 + $0x20] sm:$0xff]
    %v133 = vld [vmem:[#allocation5 + $0x28] sm:$0xff]
    %v134 = vld [vmem:[#allocation5 + $0x30] sm:$0xff]
    %v135 = vld [vmem:[#allocation5 + $0x38] sm:$0xff]
    %v136 = vld [vmem:[#allocation5 + $0x40] sm:$0xff]
    %v137 = vld [vmem:[#allocation5 + $0x48] sm:$0xff]
    %v138 = vld [vmem:[#allocation5 + $0x50] sm:$0xff]
    %v139 = vld [vmem:[#allocation5 + $0x58] sm:$0xff]
    %v140 = vld [vmem:[#allocation5 + $0x60] sm:$0xff]
    %v141 = vld [vmem:[#allocation5 + $0x68] sm:$0xff]
    %v142 = vld [vmem:[#allocation5 + $0x70] sm:$0xff]
    %v143 = vld [vmem:[#allocation5 + $0x78] sm:$0xff]
    %v144 = vld [vmem:[#allocation5 + $0x80] sm:$0xff]
    %v145 = vld [vmem:[#allocation5 + $0x88] sm:$0xff]
    %v146 = vld [vmem:[#allocation5 + $0x90] sm:$0xff]
    %v147 = vld [vmem:[#allocation5 + $0x98] sm:$0xff]
    %v148 = vld [vmem:[#allocation5 + $0xa0] sm:$0xff]
    %v149 = vld [vmem:[#allocation5 + $0xa8] sm:$0xff]
    %v150 = vld [vmem:[#allocation5 + $0xb0] sm:$0xff]
    %v151 = vld [vmem:[#allocation5 + $0xb8] sm:$0xff]
    %v152 = vld [vmem:[#allocation5 + $0xc0] sm:$0xff]
    %v153 = vld [vmem:[#allocation5 + $0xc8] sm:$0xff]
    %v154 = vld [vmem:[#allocation5 + $0xd0] sm:$0xff]
    %v155 = vld [vmem:[#allocation5 + $0xd8] sm:$0xff]
    %v156 = vld [vmem:[#allocation5 + $0xe0] sm:$0xff]
    %v157 = vld [vmem:[#allocation5 + $0xe8] sm:$0xff]
    %v158 = vld [vmem:[#allocation5 + $0xf0] sm:$0xff]
    %v159 = vld [vmem:[#allocation5 + $0xf8] sm:$0xff]
    %v160 = vld [vmem:[#allocation5 + $0x100] sm:$0xff]
    %v161 = vld [vmem:[#allocation5 + $0x108] sm:$0xff]
    %v162 = vld [vmem:[#allocation5 + $0x110] sm:$0xff]
    %v163 = vld [vmem:[#allocation5 + $0x118] sm:$0xff]
    %v164 = vld [vmem:[#allocation5 + $0x120] sm:$0xff]
    %v165 = vld [vmem:[#allocation5 + $0x128] sm:$0xff]
    %v166 = vld [vmem:[#allocation5 + $0x130] sm:$0xff]
    %v167 = vld [vmem:[#allocation5 + $0x138] sm:$0xff]
    %v168 = vld [vmem:[#allocation5 + $0x140] sm:$0xff]
    %v169 = vld [vmem:[#allocation5 + $0x148] sm:$0xff]
    %v170 = vld [vmem:[#allocation5 + $0x150] sm:$0xff]
    %v171 = vld [vmem:[#allocation5 + $0x158] sm:$0xff]
    %v172 = vld [vmem:[#allocation5 + $0x160] sm:$0xff]
    %v173 = vld [vmem:[#allocation5 + $0x168] sm:$0xff]
    %v174 = vld [vmem:[#allocation5 + $0x170] sm:$0xff]
    %v175 = vld [vmem:[#allocation5 + $0x178] sm:$0xff]
    %v176 = vld [vmem:[%s4] sm:$0x1]
    %v177 = vld [vmem:[%s4 + $0x1] sm:$0x1]
    %v178 = vld [vmem:[%s4 + $0x2] sm:$0x1]
    %v179 = vld [vmem:[%s5] sm:$0x1]
    %v180 = vld [vmem:[%s6] sm:$0x1]
    %v181 = vld [vmem:[#allocation7] sm:$0xff]
    %v182 = vld [vmem:[#allocation7 + $0x8] sm:$0xff]
    %v183 = vld [vmem:[#allocation7 + $0x10] sm:$0xff]
    %v184 = vld [vmem:[#allocation7 + $0x18] sm:$0xff]
    %v185 = vld [vmem:[#allocation7 + $0x20] sm:$0xff]
    %v186 = vld [vmem:[#allocation7 + $0x28] sm:$0xff]
    %v187 = vld [vmem:[#allocation7 + $0x30] sm:$0xff]
    %v188 = vld [vmem:[#allocation7 + $0x38] sm:$0xff]
    %v189 = vld [vmem:[#allocation7 + $0x40] sm:$0xff]
    %v190 = vld [vmem:[#allocation7 + $0x48] sm:$0xff]
    %v191 = vld [vmem:[#allocation7 + $0x50] sm:$0xff]
    %v192 = vld [vmem:[#allocation7 + $0x58] sm:$0xff]
    %v193 = vld [vmem:[#allocation7 + $0x60] sm:$0xff]
    %v194 = vld [vmem:[#allocation7 + $0x68] sm:$0xff]
    %v195 = vld [vmem:[#allocation7 + $0x70] sm:$0xff]
    %v196 = vld [vmem:[#allocation7 + $0x78] sm:$0xff]
    %v197 = vld [vmem:[%s8] sm:$0x1]
    %v198 = vld [vmem:[#allocation8] sm:$0xff]
    %v199 = vld [vmem:[#allocation8 + $0x8] sm:$0xff]
    %v200 = vld [vmem:[#allocation8 + $0x10] sm:$0xff]
    %v201 = vld [vmem:[#allocation8 + $0x18] sm:$0xff]
    %v202 = vld [vmem:[#allocation8 + $0x20] sm:$0xff]
    %v203 = vld [vmem:[#allocation8 + $0x28] sm:$0xff]
    %v204 = vld [vmem:[#allocation8 + $0x30] sm:$0xff]
    %v205 = vld [vmem:[#allocation8 + $0x38] sm:$0xff]
    %v206 = vld [vmem:[#allocation8 + $0x40] sm:$0xff]
    %v207 = vld [vmem:[#allocation8 + $0x48] sm:$0xff]
    %v208 = vld [vmem:[#allocation8 + $0x50] sm:$0xff]
    %v209 = vld [vmem:[#allocation8 + $0x58] sm:$0xff]
    %v210 = vld [vmem:[#allocation8 + $0x60] sm:$0xff]
    %v211 = vld [vmem:[#allocation8 + $0x68] sm:$0xff]
    %v212 = vld [vmem:[#allocation8 + $0x70] sm:$0xff]
    %v213 = vld [vmem:[#allocation8 + $0x78] sm:$0xff]
    %v214 = vld [vmem:[%s10] sm:$0x1]
    %v215 = vld [vmem:[#allocation10] sm:$0xff]
    %v216 = vld [vmem:[#allocation10 + $0x8] sm:$0xff]
    %v217 = vld [vmem:[#allocation10 + $0x10] sm:$0xff]
    %v218 = vld [vmem:[#allocation10 + $0x18] sm:$0xff]
    %v219 = vld [vmem:[#allocation10 + $0x20] sm:$0xff]
    %v220 = vld [vmem:[#allocation10 + $0x28] sm:$0xff]
    %v221 = vld [vmem:[#allocation10 + $0x30] sm:$0xff]
    %v222 = vld [vmem:[#allocation10 + $0x38] sm:$0xff]
    %v223 = vld [vmem:[#allocation10 + $0x40] sm:$0xff]
    %v224 = vld [vmem:[#allocation10 + $0x48] sm:$0xff]
    %v225 = vld [vmem:[#allocation10 + $0x50] sm:$0xff]
    %v226 = vld [vmem:[#allocation10 + $0x58] sm:$0xff]
    %v227 = vld [vmem:[#allocation10 + $0x60] sm:$0xff]
    %v228 = vld [vmem:[#allocation10 + $0x68] sm:$0xff]
    %v229 = vld [vmem:[#allocation10 + $0x70] sm:$0xff]
    %v230 = vld [vmem:[#allocation10 + $0x78] sm:$0xff]
    %v231 = vld [vmem:[#allocation10 + $0x80] sm:$0xff]
    %v232 = vld [vmem:[#allocation10 + $0x88] sm:$0xff]
    %v233 = vld [vmem:[#allocation10 + $0x90] sm:$0xff]
    %v234 = vld [vmem:[#allocation10 + $0x98] sm:$0xff]
    %v235 = vld [vmem:[#allocation10 + $0xa0] sm:$0xff]
    %v236 = vld [vmem:[#allocation10 + $0xa8] sm:$0xff]
    %v237 = vld [vmem:[#allocation10 + $0xb0] sm:$0xff]
    %v238 = vld [vmem:[#allocation10 + $0xb8] sm:$0xff]
    %v239 = vld [vmem:[#allocation10 + $0xc0] sm:$0xff]
    %v240 = vld [vmem:[#allocation10 + $0xc8] sm:$0xff]
    %v241 = vld [vmem:[#allocation10 + $0xd0] sm:$0xff]
    %v242 = vld [vmem:[#allocation10 + $0xd8] sm:$0xff]
    %v243 = vld [vmem:[#allocation10 + $0xe0] sm:$0xff]
    %v244 = vld [vmem:[#allocation10 + $0xe8] sm:$0xff]
    %v245 = vld [vmem:[#allocation10 + $0xf0] sm:$0xff]
    %v246 = vld [vmem:[#allocation10 + $0xf8] sm:$0xff]
    %v247 = vld [vmem:[#allocation10 + $0x100] sm:$0xff]
    %v248 = vld [vmem:[#allocation10 + $0x108] sm:$0xff]
    %v249 = vld [vmem:[#allocation10 + $0x110] sm:$0xff]
    %v250 = vld [vmem:[#allocation10 + $0x118] sm:$0xff]
    %v251 = vld [vmem:[#allocation10 + $0x120] sm:$0xff]
    %v252 = vld [vmem:[#allocation10 + $0x128] sm:$0xff]
    %v253 = vld [vmem:[#allocation10 + $0x130] sm:$0xff]
    %v254 = vld [vmem:[#allocation10 + $0x138] sm:$0xff]
    %v255 = vld [vmem:[#allocation10 + $0x140] sm:$0xff]
    %v256 = vld [vmem:[#allocation10 + $0x148] sm:$0xff]
    %v257 = vld [vmem:[#allocation10 + $0x150] sm:$0xff]
    %v258 = vld [vmem:[#allocation10 + $0x158] sm:$0xff]
    %v259 = vld [vmem:[#allocation10 + $0x160] sm:$0xff]
    %v260 = vld [vmem:[#allocation10 + $0x168] sm:$0xff]
    %v261 = vld [vmem:[#allocation10 + $0x170] sm:$0xff]
    %v262 = vld [vmem:[#allocation10 + $0x178] sm:$0xff]
    %v263 = vld [vmem:[#allocation10 + $0x180] sm:$0xff]
    %v264 = vld [vmem:[#allocation10 + $0x188] sm:$0xff]
    %v265 = vld [vmem:[#allocation10 + $0x190] sm:$0xff]
    %v266 = vld [vmem:[#allocation10 + $0x198] sm:$0xff]
    %v267 = vld [vmem:[#allocation10 + $0x1a0] sm:$0xff]
    %v268 = vld [vmem:[#allocation10 + $0x1a8] sm:$0xff]
    %v269 = vld [vmem:[#allocation10 + $0x1b0] sm:$0xff]
    %v270 = vld [vmem:[#allocation10 + $0x1b8] sm:$0xff]
    %v271 = vld [vmem:[#allocation10 + $0x1c0] sm:$0xff]
    %v272 = vld [vmem:[#allocation10 + $0x1c8] sm:$0xff]
    %v273 = vld [vmem:[#allocation10 + $0x1d0] sm:$0xff]
    %v274 = vld [vmem:[#allocation10 + $0x1d8] sm:$0xff]
    %v275 = vld [vmem:[#allocation10 + $0x1e0] sm:$0xff]
    %v276 = vld [vmem:[#allocation10 + $0x1e8] sm:$0xff]
    %v277 = vld [vmem:[#allocation10 + $0x1f0] sm:$0xff]
    %v278 = vld [vmem:[#allocation10 + $0x1f8] sm:$0xff]
    %v279 = vld [vmem:[%s12] sm:$0x1]
    %v280 = vld [vmem:[%s12 + $0x1] sm:$0x1]
    %v281 = vld [vmem:[%s12 + $0x2] sm:$0x1]
    %v282 = vld [vmem:[%s12 + $0x3] sm:$0x1]
    %v283 = vld [vmem:[%s13] sm:$0x1]
    %v284 = vld [vmem:[%s14] sm:$0x1]
    %v285 = vld [vmem:[%s0] sm:$0x3]
    %v287 = vlaneseq
    %v288 = vshrl.u32 %v287, 7
    %v289 = vsub.s32 0, %v288
    %v290 = vrot.slane %v127, %v289
    %vm292 = vcmask 523264
    %v294 = vsel %vm292, %v285, 0
    %296 = vmatprep.subr.mxu0 0.0
    %297 = vmatpush1.msra.mxu0 %v119
    %298 = vmatprep.subr.mxu0 0.0
    %299 = vmatpush1.msra.mxu0 %v120
    %300 = vmatprep.subr.mxu0 0.0
    %301 = vmatpush1.msra.mxu0 %v121
    %302 = vmatprep.subr.mxu0 0.0
    %303 = vmatpush1.msra.mxu0 %v122
    %304 = vmatprep.subr.mxu0 0.0
    %305 = vmatpush1.msra.mxu0 %v123
    %306 = vmatprep.subr.mxu0 0.0
    %307 = vmatpush1.msra.mxu0 %v124
    %308 = vmatprep.subr.mxu0 0.0
    %309 = vmatpush1.msra.mxu0 %v125
    %310 = vmatprep.subr.mxu0 0.0
    %311 = vmatpush1.msra.mxu0 %v126
    %312 = vmatprep.subr.mxu0 0.0
    %313 = vmatpush1.msra.mxu0 0.0
    %314 = vmatprep.subr.mxu0 0.0
    %315 = vmatpush1.msra.mxu0 0.0
    %316 = vmatprep.subr.mxu0 0.0
    %317 = vmatpush1.msra.mxu0 0.0
    %318 = vmatprep.subr.mxu0 0.0
    %319 = vmatpush1.msra.mxu0 0.0
    %320 = vmatprep.subr.mxu0 0.0
    %321 = vmatpush1.msra.mxu0 0.0
    %322 = vmatprep.subr.mxu0 0.0
    %323 = vmatpush1.msra.mxu0 0.0
    %324 = vmatprep.subr.mxu0 0.0
    %325 = vmatpush1.msra.mxu0 0.0
    %326 = vmatprep.subr.mxu0 0.0
    %327 = vmatpush1.msra.mxu0 0.0
    %328 = vmatprep.subr.mxu0 0.0
    %329 = vmatpush1.msra.mxu0 0.0
    %330 = vmatprep.subr.mxu0 0.0
    %331 = vmatpush1.msra.mxu0 0.0
    %332 = vmatprep.subr.mxu0 0.0
    %333 = vmatpush1.msra.mxu0 0.0
    %334 = vmatprep.subr.mxu0 0.0
    %335 = vmatpush1.msra.mxu0 0.0
    %336 = vmatprep.subr.mxu0 0.0
    %337 = vmatpush1.msra.mxu0 0.0
    %338 = vmatprep.subr.mxu0 0.0
    %339 = vmatpush1.msra.mxu0 0.0
    %340 = vmatprep.subr.mxu0 0.0
    %341 = vmatpush1.msra.mxu0 0.0
    %342 = vmatprep.subr.mxu0 0.0
    %343 = vmatpush1.msra.mxu0 0.0
    %344 = vmatprep.subr.mxu0 0.0
    %345 = vmatpush1.msra.mxu0 0.0
    %346 = vmatprep.subr.mxu0 0.0
    %347 = vmatpush1.msra.mxu0 0.0
    %348 = vmatprep.subr.mxu0 0.0
    %349 = vmatpush1.msra.mxu0 0.0
    %350 = vmatprep.subr.mxu0 0.0
    %351 = vmatpush1.msra.mxu0 0.0
    %352 = vmatprep.subr.mxu0 0.0
    %353 = vmatpush1.msra.mxu0 0.0
    %354 = vmatprep.subr.mxu0 0.0
    %355 = vmatpush1.msra.mxu0 0.0
    %356 = vmatprep.subr.mxu0 0.0
    %357 = vmatpush1.msra.mxu0 0.0
    %358 = vmatprep.subr.mxu0 0.0
    %359 = vmatpush1.msra.mxu0 0.0
    %360 = vmatprep.mubr.f32.mxu0 0.0
    %361 = vmatmul.mubr.f32.gmra.mrb[0].mxu0 %v294
    %v362 = vpop.f32.mrb[0].mxu0
    %v363 = vadd.f32 %v290, %v362
    %v364 = vpop.f32.mrb[0].mxu0
    %365 = vdwg.mxu0
    %v367 = vlaneseq
    %v368 = vshrl.u32 %v367, 7
    %v369 = vsub.s32 0, %v368
    %v370 = vrot.slane %v176, %v369
    %372 = vmatprep.subr.mxu0 0.0
    %373 = vmatpush1.msra.mxu0 %v128
    %374 = vmatprep.subr.mxu0 0.0
    %375 = vmatpush1.msra.mxu0 %v129
    %376 = vmatprep.subr.mxu0 0.0
    %377 = vmatpush1.msra.mxu0 %v130
    %378 = vmatprep.subr.mxu0 0.0
    %379 = vmatpush1.msra.mxu0 %v131
    %380 = vmatprep.subr.mxu0 0.0
    %381 = vmatpush1.msra.mxu0 %v132
    %382 = vmatprep.subr.mxu0 0.0
    %383 = vmatpush1.msra.mxu0 %v133
    %384 = vmatprep.subr.mxu0 0.0
    %385 = vmatpush1.msra.mxu0 %v134
    %386 = vmatprep.subr.mxu0 0.0
    %387 = vmatpush1.msra.mxu0 %v135
    %388 = vmatprep.subr.mxu0 0.0
    %389 = vmatpush1.msra.mxu0 %v136
    %390 = vmatprep.subr.mxu0 0.0
    %391 = vmatpush1.msra.mxu0 %v137
    %392 = vmatprep.subr.mxu0 0.0
    %393 = vmatpush1.msra.mxu0 %v138
    %394 = vmatprep.subr.mxu0 0.0
    %395 = vmatpush1.msra.mxu0 %v139
    %396 = vmatprep.subr.mxu0 0.0
    %397 = vmatpush1.msra.mxu0 %v140
    %398 = vmatprep.subr.mxu0 0.0
    %399 = vmatpush1.msra.mxu0 %v141
    %400 = vmatprep.subr.mxu0 0.0
    %401 = vmatpush1.msra.mxu0 %v142
    %402 = vmatprep.subr.mxu0 0.0
    %403 = vmatpush1.msra.mxu0 %v143
    %404 = vmatprep.subr.mxu0 0.0
    %405 = vmatpush1.msra.mxu0 0.0
    %406 = vmatprep.subr.mxu0 0.0
    %407 = vmatpush1.msra.mxu0 0.0
    %408 = vmatprep.subr.mxu0 0.0
    %409 = vmatpush1.msra.mxu0 0.0
    %410 = vmatprep.subr.mxu0 0.0
    %411 = vmatpush1.msra.mxu0 0.0
    %412 = vmatprep.subr.mxu0 0.0
    %413 = vmatpush1.msra.mxu0 0.0
    %414 = vmatprep.subr.mxu0 0.0
    %415 = vmatpush1.msra.mxu0 0.0
    %416 = vmatprep.subr.mxu0 0.0
    %417 = vmatpush1.msra.mxu0 0.0
    %418 = vmatprep.subr.mxu0 0.0
    %419 = vmatpush1.msra.mxu0 0.0
    %420 = vmatprep.subr.mxu0 0.0
    %421 = vmatpush1.msra.mxu0 0.0
    %422 = vmatprep.subr.mxu0 0.0
    %423 = vmatpush1.msra.mxu0 0.0
    %424 = vmatprep.subr.mxu0 0.0
    %425 = vmatpush1.msra.mxu0 0.0
    %426 = vmatprep.subr.mxu0 0.0
    %427 = vmatpush1.msra.mxu0 0.0
    %428 = vmatprep.subr.mxu0 0.0
    %429 = vmatpush1.msra.mxu0 0.0
    %430 = vmatprep.subr.mxu0 0.0
    %431 = vmatpush1.msra.mxu0 0.0
    %432 = vmatprep.subr.mxu0 0.0
    %433 = vmatpush1.msra.mxu0 0.0
    %434 = vmatprep.subr.mxu0 0.0
    %435 = vmatpush1.msra.mxu0 0.0
    %436 = vmatprep.mubr.f32.mxu0 0.0
    %437 = vmatmul.mubr.f32.gmra.mrb[0].mxu0 %v363
    %v438 = vpop.f32.mrb[0].mxu0
    %v439 = vadd.f32 %v370, %v438
    %v440 = vpop.f32.mrb[0].mxu0
    %441 = vdwg.mxu0
    %v442 = vmax.f32 %v439, 0.0
    %v444 = vlaneseq
    %v445 = vshrl.u32 %v444, 7
    %v446 = vsub.s32 0, %v445
    %v447 = vrot.slane %v177, %v446
    %449 = vmatprep.subr.mxu0 0.0
    %450 = vmatpush1.msra.mxu0 %v144
    %451 = vmatprep.subr.mxu0 0.0
    %452 = vmatpush1.msra.mxu0 %v145
    %453 = vmatprep.subr.mxu0 0.0
    %454 = vmatpush1.msra.mxu0 %v146
    %455 = vmatprep.subr.mxu0 0.0
    %456 = vmatpush1.msra.mxu0 %v147
    %457 = vmatprep.subr.mxu0 0.0
    %458 = vmatpush1.msra.mxu0 %v148
    %459 = vmatprep.subr.mxu0 0.0
    %460 = vmatpush1.msra.mxu0 %v149
    %461 = vmatprep.subr.mxu0 0.0
    %462 = vmatpush1.msra.mxu0 %v150
    %463 = vmatprep.subr.mxu0 0.0
    %464 = vmatpush1.msra.mxu0 %v151
    %465 = vmatprep.subr.mxu0 0.0
    %466 = vmatpush1.msra.mxu0 %v152
    %467 = vmatprep.subr.mxu0 0.0
    %468 = vmatpush1.msra.mxu0 %v153
    %469 = vmatprep.subr.mxu0 0.0
    %470 = vmatpush1.msra.mxu0 %v154
    %471 = vmatprep.subr.mxu0 0.0
    %472 = vmatpush1.msra.mxu0 %v155
    %473 = vmatprep.subr.mxu0 0.0
    %474 = vmatpush1.msra.mxu0 %v156
    %475 = vmatprep.subr.mxu0 0.0
    %476 = vmatpush1.msra.mxu0 %v157
    %477 = vmatprep.subr.mxu0 0.0
    %478 = vmatpush1.msra.mxu0 %v158
    %479 = vmatprep.subr.mxu0 0.0
    %480 = vmatpush1.msra.mxu0 %v159
    %481 = vmatprep.subr.mxu0 0.0
    %482 = vmatpush1.msra.mxu0 0.0
    %483 = vmatprep.subr.mxu0 0.0
    %484 = vmatpush1.msra.mxu0 0.0
    %485 = vmatprep.subr.mxu0 0.0
    %486 = vmatpush1.msra.mxu0 0.0
    %487 = vmatprep.subr.mxu0 0.0
    %488 = vmatpush1.msra.mxu0 0.0
    %489 = vmatprep.subr.mxu0 0.0
    %490 = vmatpush1.msra.mxu0 0.0
    %491 = vmatprep.subr.mxu0 0.0
    %492 = vmatpush1.msra.mxu0 0.0
    %493 = vmatprep.subr.mxu0 0.0
    %494 = vmatpush1.msra.mxu0 0.0
    %495 = vmatprep.subr.mxu0 0.0
    %496 = vmatpush1.msra.mxu0 0.0
    %497 = vmatprep.subr.mxu0 0.0
    %498 = vmatpush1.msra.mxu0 0.0
    %499 = vmatprep.subr.mxu0 0.0
    %500 = vmatpush1.msra.mxu0 0.0
    %501 = vmatprep.subr.mxu0 0.0
    %502 = vmatpush1.msra.mxu0 0.0
    %503 = vmatprep.subr.mxu0 0.0
    %504 = vmatpush1.msra.mxu0 0.0
    %505 = vmatprep.subr.mxu0 0.0
    %506 = vmatpush1.msra.mxu0 0.0
    %507 = vmatprep.subr.mxu0 0.0
    %508 = vmatpush1.msra.mxu0 0.0
    %509 = vmatprep.subr.mxu0 0.0
    %510 = vmatpush1.msra.mxu0 0.0
    %511 = vmatprep.subr.mxu0 0.0
    %512 = vmatpush1.msra.mxu0 0.0
    %513 = vmatprep.mubr.f32.mxu0 0.0
    %514 = vmatmul.mubr.f32.gmra.mrb[0].mxu0 %v442
    %v515 = vpop.f32.mrb[0].mxu0
    %v516 = vadd.f32 %v447, %v515
    %v517 = vpop.f32.mrb[0].mxu0
    %518 = vdwg.mxu0
    %v519 = vmax.f32 %v516, 0.0
    %v520 = vadd.f32 %v519, %v442
    %v522 = vlaneseq
    %v523 = vshrl.u32 %v522, 7
    %v524 = vsub.s32 0, %v523
    %v525 = vrot.slane %v178, %v524
    %527 = vmatprep.subr.mxu0 0.0
    %528 = vmatpush1.msra.mxu0 %v160
    %529 = vmatprep.subr.mxu0 0.0
    %530 = vmatpush1.msra.mxu0 %v161
    %531 = vmatprep.subr.mxu0 0.0
    %532 = vmatpush1.msra.mxu0 %v162
    %533 = vmatprep.subr.mxu0 0.0
    %534 = vmatpush1.msra.mxu0 %v163
    %535 = vmatprep.subr.mxu0 0.0
    %536 = vmatpush1.msra.mxu0 %v164
    %537 = vmatprep.subr.mxu0 0.0
    %538 = vmatpush1.msra.mxu0 %v165
    %539 = vmatprep.subr.mxu0 0.0
    %540 = vmatpush1.msra.mxu0 %v166
    %541 = vmatprep.subr.mxu0 0.0
    %542 = vmatpush1.msra.mxu0 %v167
    %543 = vmatprep.subr.mxu0 0.0
    %544 = vmatpush1.msra.mxu0 %v168
    %545 = vmatprep.subr.mxu0 0.0
    %546 = vmatpush1.msra.mxu0 %v169
    %547 = vmatprep.subr.mxu0 0.0
    %548 = vmatpush1.msra.mxu0 %v170
    %549 = vmatprep.subr.mxu0 0.0
    %550 = vmatpush1.msra.mxu0 %v171
    %551 = vmatprep.subr.mxu0 0.0
    %552 = vmatpush1.msra.mxu0 %v172
    %553 = vmatprep.subr.mxu0 0.0
    %554 = vmatpush1.msra.mxu0 %v173
    %555 = vmatprep.subr.mxu0 0.0
    %556 = vmatpush1.msra.mxu0 %v174
    %557 = vmatprep.subr.mxu0 0.0
    %558 = vmatpush1.msra.mxu0 %v175
    %559 = vmatprep.subr.mxu0 0.0
    %560 = vmatpush1.msra.mxu0 0.0
    %561 = vmatprep.subr.mxu0 0.0
    %562 = vmatpush1.msra.mxu0 0.0
    %563 = vmatprep.subr.mxu0 0.0
    %564 = vmatpush1.msra.mxu0 0.0
    %565 = vmatprep.subr.mxu0 0.0
    %566 = vmatpush1.msra.mxu0 0.0
    %567 = vmatprep.subr.mxu0 0.0
    %568 = vmatpush1.msra.mxu0 0.0
    %569 = vmatprep.subr.mxu0 0.0
    %570 = vmatpush1.msra.mxu0 0.0
    %571 = vmatprep.subr.mxu0 0.0
    %572 = vmatpush1.msra.mxu0 0.0
    %573 = vmatprep.subr.mxu0 0.0
    %574 = vmatpush1.msra.mxu0 0.0
    %575 = vmatprep.subr.mxu0 0.0
    %576 = vmatpush1.msra.mxu0 0.0
    %577 = vmatprep.subr.mxu0 0.0
    %578 = vmatpush1.msra.mxu0 0.0
    %579 = vmatprep.subr.mxu0 0.0
    %580 = vmatpush1.msra.mxu0 0.0
    %581 = vmatprep.subr.mxu0 0.0
    %582 = vmatpush1.msra.mxu0 0.0
    %583 = vmatprep.subr.mxu0 0.0
    %584 = vmatpush1.msra.mxu0 0.0
    %585 = vmatprep.subr.mxu0 0.0
    %586 = vmatpush1.msra.mxu0 0.0
    %587 = vmatprep.subr.mxu0 0.0
    %588 = vmatpush1.msra.mxu0 0.0
    %589 = vmatprep.subr.mxu0 0.0
    %590 = vmatpush1.msra.mxu0 0.0
    %591 = vmatprep.mubr.f32.mxu0 0.0
    %592 = vmatmul.mubr.f32.gmra.mrb[0].mxu0 %v520
    %v593 = vpop.f32.mrb[0].mxu0
    %v594 = vadd.f32 %v525, %v593
    %v595 = vpop.f32.mrb[0].mxu0
    %596 = vdwg.mxu0
    %v597 = vmax.f32 %v594, 0.0
    %v599 = vlaneseq
    %v600 = vshrl.u32 %v599, 7
    %v601 = vsub.s32 0, %v600
    %v602 = vrot.slane %v179, %v601
    %v604 = vmul.f32 %v597, %v602
    %v606 = vlaneseq
    %v607 = vshrl.u32 %v606, 7
    %v608 = vsub.s32 0, %v607
    %v609 = vrot.slane %v180, %v608
    %v611 = vadd.f32 %v604, %v609
    %v613 = vlaneseq
    %v614 = vshrl.u32 %v613, 7
    %v615 = vsub.s32 0, %v614
    %v616 = vrot.slane %v197, %v615
    %618 = vmatprep.subr.mxu0 0.0
    %619 = vmatpush1.msra.mxu0 %v181
    %620 = vmatprep.subr.mxu0 0.0
    %621 = vmatpush1.msra.mxu0 %v182
    %622 = vmatprep.subr.mxu0 0.0
    %623 = vmatpush1.msra.mxu0 %v183
    %624 = vmatprep.subr.mxu0 0.0
    %625 = vmatpush1.msra.mxu0 %v184
    %626 = vmatprep.subr.mxu0 0.0
    %627 = vmatpush1.msra.mxu0 %v185
    %628 = vmatprep.subr.mxu0 0.0
    %629 = vmatpush1.msra.mxu0 %v186
    %630 = vmatprep.subr.mxu0 0.0
    %631 = vmatpush1.msra.mxu0 %v187
    %632 = vmatprep.subr.mxu0 0.0
    %633 = vmatpush1.msra.mxu0 %v188
    %634 = vmatprep.subr.mxu0 0.0
    %635 = vmatpush1.msra.mxu0 %v189
    %636 = vmatprep.subr.mxu0 0.0
    %637 = vmatpush1.msra.mxu0 %v190
    %638 = vmatprep.subr.mxu0 0.0
    %639 = vmatpush1.msra.mxu0 %v191
    %640 = vmatprep.subr.mxu0 0.0
    %641 = vmatpush1.msra.mxu0 %v192
    %642 = vmatprep.subr.mxu0 0.0
    %643 = vmatpush1.msra.mxu0 %v193
    %644 = vmatprep.subr.mxu0 0.0
    %645 = vmatpush1.msra.mxu0 %v194
    %646 = vmatprep.subr.mxu0 0.0
    %647 = vmatpush1.msra.mxu0 %v195
    %648 = vmatprep.subr.mxu0 0.0
    %649 = vmatpush1.msra.mxu0 %v196
    %650 = vmatprep.subr.mxu0 0.0
    %651 = vmatpush1.msra.mxu0 0.0
    %652 = vmatprep.subr.mxu0 0.0
    %653 = vmatpush1.msra.mxu0 0.0
    %654 = vmatprep.subr.mxu0 0.0
    %655 = vmatpush1.msra.mxu0 0.0
    %656 = vmatprep.subr.mxu0 0.0
    %657 = vmatpush1.msra.mxu0 0.0
    %658 = vmatprep.subr.mxu0 0.0
    %659 = vmatpush1.msra.mxu0 0.0
    %660 = vmatprep.subr.mxu0 0.0
    %661 = vmatpush1.msra.mxu0 0.0
    %662 = vmatprep.subr.mxu0 0.0
    %663 = vmatpush1.msra.mxu0 0.0
    %664 = vmatprep.subr.mxu0 0.0
    %665 = vmatpush1.msra.mxu0 0.0
    %666 = vmatprep.subr.mxu0 0.0
    %667 = vmatpush1.msra.mxu0 0.0
    %668 = vmatprep.subr.mxu0 0.0
    %669 = vmatpush1.msra.mxu0 0.0
    %670 = vmatprep.subr.mxu0 0.0
    %671 = vmatpush1.msra.mxu0 0.0
    %672 = vmatprep.subr.mxu0 0.0
    %673 = vmatpush1.msra.mxu0 0.0
    %674 = vmatprep.subr.mxu0 0.0
    %675 = vmatpush1.msra.mxu0 0.0
    %676 = vmatprep.subr.mxu0 0.0
    %677 = vmatpush1.msra.mxu0 0.0
    %678 = vmatprep.subr.mxu0 0.0
    %679 = vmatpush1.msra.mxu0 0.0
    %680 = vmatprep.subr.mxu0 0.0
    %681 = vmatpush1.msra.mxu0 0.0
    %682 = vmatprep.mubr.f32.mxu0 0.0
    %683 = vmatmul.mubr.f32.gmra.mrb[0].mxu0 %v611
    %v684 = vpop.f32.mrb[0].mxu0
    %v685 = vadd.f32 %v616, %v684
    %v686 = vpop.f32.mrb[0].mxu0
    %687 = vdwg.mxu0
    %vm688 = vcmask 1041408
    %v689 = vsel %vm688, %v685, -inf
    %v690 = vrot.slane %v689, 4
    %v691 = vmax.f32 %v689, %v690
    %v692 = vrot.slane %v691, 2
    %v693 = vmax.f32 %v691, %v692
    %v694 = vrot.slane %v693, 1
    %v695 = vmax.f32 %v693, %v694
    %v696 = vsub.f32 %v685, %v695
    %v697 = vmul.f32 %v696, 1.442695
    %v698 = vpow.pop %v697
    %v699 = vsel %vm688, %v698, 0.0
    %v700 = vrot.slane %v699, 4
    %v701 = vadd.f32 %v699, %v700
    %v702 = vrot.slane %v701, 2
    %v703 = vadd.f32 %v701, %v702
    %v704 = vrot.slane %v703, 1
    %v705 = vadd.f32 %v703, %v704
    %v706 = vrcp.pop %v705
    %v707 = vmul.f32 %v698, %v706
    %v708 = vmul.f32 %v707, %v611
    %v710 = vlaneseq
    %v711 = vshrl.u32 %v710, 7
    %v712 = vsub.s32 0, %v711
    %v713 = vrot.slane %v214, %v712
    %715 = vmatprep.subr.mxu0 0.0
    %716 = vmatpush1.msra.mxu0 %v198
    %717 = vmatprep.subr.mxu0 0.0
    %718 = vmatpush1.msra.mxu0 %v199
    %719 = vmatprep.subr.mxu0 0.0
    %720 = vmatpush1.msra.mxu0 %v200
    %721 = vmatprep.subr.mxu0 0.0
    %722 = vmatpush1.msra.mxu0 %v201
    %723 = vmatprep.subr.mxu0 0.0
    %724 = vmatpush1.msra.mxu0 %v202
    %725 = vmatprep.subr.mxu0 0.0
    %726 = vmatpush1.msra.mxu0 %v203
    %727 = vmatprep.subr.mxu0 0.0
    %728 = vmatpush1.msra.mxu0 %v204
    %729 = vmatprep.subr.mxu0 0.0
    %730 = vmatpush1.msra.mxu0 %v205
    %731 = vmatprep.subr.mxu0 0.0
    %732 = vmatpush1.msra.mxu0 %v206
    %733 = vmatprep.subr.mxu0 0.0
    %734 = vmatpush1.msra.mxu0 %v207
    %735 = vmatprep.subr.mxu0 0.0
    %736 = vmatpush1.msra.mxu0 %v208
    %737 = vmatprep.subr.mxu0 0.0
    %738 = vmatpush1.msra.mxu0 %v209
    %739 = vmatprep.subr.mxu0 0.0
    %740 = vmatpush1.msra.mxu0 %v210
    %741 = vmatprep.subr.mxu0 0.0
    %742 = vmatpush1.msra.mxu0 %v211
    %743 = vmatprep.subr.mxu0 0.0
    %744 = vmatpush1.msra.mxu0 %v212
    %745 = vmatprep.subr.mxu0 0.0
    %746 = vmatpush1.msra.mxu0 %v213
    %747 = vmatprep.subr.mxu0 0.0
    %748 = vmatpush1.msra.mxu0 0.0
    %749 = vmatprep.subr.mxu0 0.0
    %750 = vmatpush1.msra.mxu0 0.0
    %751 = vmatprep.subr.mxu0 0.0
    %752 = vmatpush1.msra.mxu0 0.0
    %753 = vmatprep.subr.mxu0 0.0
    %754 = vmatpush1.msra.mxu0 0.0
    %755 = vmatprep.subr.mxu0 0.0
    %756 = vmatpush1.msra.mxu0 0.0
    %757 = vmatprep.subr.mxu0 0.0
    %758 = vmatpush1.msra.mxu0 0.0
    %759 = vmatprep.subr.mxu0 0.0
    %760 = vmatpush1.msra.mxu0 0.0
    %761 = vmatprep.subr.mxu0 0.0
    %762 = vmatpush1.msra.mxu0 0.0
    %763 = vmatprep.subr.mxu0 0.0
    %764 = vmatpush1.msra.mxu0 0.0
    %765 = vmatprep.subr.mxu0 0.0
    %766 = vmatpush1.msra.mxu0 0.0
    %767 = vmatprep.subr.mxu0 0.0
    %768 = vmatpush1.msra.mxu0 0.0
    %769 = vmatprep.subr.mxu0 0.0
    %770 = vmatpush1.msra.mxu0 0.0
    %771 = vmatprep.subr.mxu0 0.0
    %772 = vmatpush1.msra.mxu0 0.0
    %773 = vmatprep.subr.mxu0 0.0
    %774 = vmatpush1.msra.mxu0 0.0
    %775 = vmatprep.subr.mxu0 0.0
    %776 = vmatpush1.msra.mxu0 0.0
    %777 = vmatprep.subr.mxu0 0.0
    %778 = vmatpush1.msra.mxu0 0.0
    %779 = vmatprep.mubr.f32.mxu0 0.0
    %780 = vmatmul.mubr.f32.gmra.mrb[0].mxu0 %v708
    %v781 = vpop.f32.mrb[0].mxu0
    %v782 = vadd.f32 %v713, %v781
    %v783 = vpop.f32.mrb[0].mxu0
    %784 = vdwg.mxu0
    %v785 = vmax.f32 %v782, 0.0
    %v787 = vlaneseq
    %v788 = vshrl.u32 %v787, 7
    %v789 = vsub.s32 0, %v788
    %v790 = vrot.slane %v279, %v789
    %792 = vmatprep.subr.mxu0 0.0
    %793 = vmatpush1.msra.mxu0 %v215
    %794 = vmatprep.subr.mxu0 0.0
    %795 = vmatpush1.msra.mxu0 %v216
    %796 = vmatprep.subr.mxu0 0.0
    %797 = vmatpush1.msra.mxu0 %v217
    %798 = vmatprep.subr.mxu0 0.0
    %799 = vmatpush1.msra.mxu0 %v218
    %800 = vmatprep.subr.mxu0 0.0
    %801 = vmatpush1.msra.mxu0 %v219
    %802 = vmatprep.subr.mxu0 0.0
    %803 = vmatpush1.msra.mxu0 %v220
    %804 = vmatprep.subr.mxu0 0.0
    %805 = vmatpush1.msra.mxu0 %v221
    %806 = vmatprep.subr.mxu0 0.0
    %807 = vmatpush1.msra.mxu0 %v222
    %808 = vmatprep.subr.mxu0 0.0
    %809 = vmatpush1.msra.mxu0 %v223
    %810 = vmatprep.subr.mxu0 0.0
    %811 = vmatpush1.msra.mxu0 %v224
    %812 = vmatprep.subr.mxu0 0.0
    %813 = vmatpush1.msra.mxu0 %v225
    %814 = vmatprep.subr.mxu0 0.0
    %815 = vmatpush1.msra.mxu0 %v226
    %816 = vmatprep.subr.mxu0 0.0
    %817 = vmatpush1.msra.mxu0 %v227
    %818 = vmatprep.subr.mxu0 0.0
    %819 = vmatpush1.msra.mxu0 %v228
    %820 = vmatprep.subr.mxu0 0.0
    %821 = vmatpush1.msra.mxu0 %v229
    %822 = vmatprep.subr.mxu0 0.0
    %823 = vmatpush1.msra.mxu0 %v230
    %824 = vmatprep.subr.mxu0 0.0
    %825 = vmatpush1.msra.mxu0 0.0
    %826 = vmatprep.subr.mxu0 0.0
    %827 = vmatpush1.msra.mxu0 0.0
    %828 = vmatprep.subr.mxu0 0.0
    %829 = vmatpush1.msra.mxu0 0.0
    %830 = vmatprep.subr.mxu0 0.0
    %831 = vmatpush1.msra.mxu0 0.0
    %832 = vmatprep.subr.mxu0 0.0
    %833 = vmatpush1.msra.mxu0 0.0
    %834 = vmatprep.subr.mxu0 0.0
    %835 = vmatpush1.msra.mxu0 0.0
    %836 = vmatprep.subr.mxu0 0.0
    %837 = vmatpush1.msra.mxu0 0.0
    %838 = vmatprep.subr.mxu0 0.0
    %839 = vmatpush1.msra.mxu0 0.0
    %840 = vmatprep.subr.mxu0 0.0
    %841 = vmatpush1.msra.mxu0 0.0
    %842 = vmatprep.subr.mxu0 0.0
    %843 = vmatpush1.msra.mxu0 0.0
    %844 = vmatprep.subr.mxu0 0.0
    %845 = vmatpush1.msra.mxu0 0.0
    %846 = vmatprep.subr.mxu0 0.0
    %847 = vmatpush1.msra.mxu0 0.0
    %848 = vmatprep.subr.mxu0 0.0
    %849 = vmatpush1.msra.mxu0 0.0
    %850 = vmatprep.subr.mxu0 0.0
    %851 = vmatpush1.msra.mxu0 0.0
    %852 = vmatprep.subr.mxu0 0.0
    %853 = vmatpush1.msra.mxu0 0.0
    %854 = vmatprep.subr.mxu0 0.0
    %855 = vmatpush1.msra.mxu0 0.0
    %856 = vmatprep.mubr.f32.mxu0 0.0
    %857 = vmatmul.mubr.f32.gmra.mrb[0].mxu0 %v785
    %v858 = vpop.f32.mrb[0].mxu0
    %v859 = vadd.f32 %v790, %v858
    %v860 = vpop.f32.mrb[0].mxu0
    %861 = vdwg.mxu0
    %v862 = vmax.f32 %v859, 0.0
    %v864 = vlaneseq
    %v865 = vshrl.u32 %v864, 7
    %v866 = vsub.s32 0, %v865
    %v867 = vrot.slane %v280, %v866
    %869 = vmatprep.subr.mxu0 0.0
    %870 = vmatpush1.msra.mxu0 %v231
    %871 = vmatprep.subr.mxu0 0.0
    %872 = vmatpush1.msra.mxu0 %v232
    %873 = vmatprep.subr.mxu0 0.0
    %874 = vmatpush1.msra.mxu0 %v233
    %875 = vmatprep.subr.mxu0 0.0
    %876 = vmatpush1.msra.mxu0 %v234
    %877 = vmatprep.subr.mxu0 0.0
    %878 = vmatpush1.msra.mxu0 %v235
    %879 = vmatprep.subr.mxu0 0.0
    %880 = vmatpush1.msra.mxu0 %v236
    %881 = vmatprep.subr.mxu0 0.0
    %882 = vmatpush1.msra.mxu0 %v237
    %883 = vmatprep.subr.mxu0 0.0
    %884 = vmatpush1.msra.mxu0 %v238
    %885 = vmatprep.subr.mxu0 0.0
    %886 = vmatpush1.msra.mxu0 %v239
    %887 = vmatprep.subr.mxu0 0.0
    %888 = vmatpush1.msra.mxu0 %v240
    %889 = vmatprep.subr.mxu0 0.0
    %890 = vmatpush1.msra.mxu0 %v241
    %891 = vmatprep.subr.mxu0 0.0
    %892 = vmatpush1.msra.mxu0 %v242
    %893 = vmatprep.subr.mxu0 0.0
    %894 = vmatpush1.msra.mxu0 %v243
    %895 = vmatprep.subr.mxu0 0.0
    %896 = vmatpush1.msra.mxu0 %v244
    %897 = vmatprep.subr.mxu0 0.0
    %898 = vmatpush1.msra.mxu0 %v245
    %899 = vmatprep.subr.mxu0 0.0
    %900 = vmatpush1.msra.mxu0 %v246
    %901 = vmatprep.subr.mxu0 0.0
    %902 = vmatpush1.msra.mxu0 0.0
    %903 = vmatprep.subr.mxu0 0.0
    %904 = vmatpush1.msra.mxu0 0.0
    %905 = vmatprep.subr.mxu0 0.0
    %906 = vmatpush1.msra.mxu0 0.0
    %907 = vmatprep.subr.mxu0 0.0
    %908 = vmatpush1.msra.mxu0 0.0
    %909 = vmatprep.subr.mxu0 0.0
    %910 = vmatpush1.msra.mxu0 0.0
    %911 = vmatprep.subr.mxu0 0.0
    %912 = vmatpush1.msra.mxu0 0.0
    %913 = vmatprep.subr.mxu0 0.0
    %914 = vmatpush1.msra.mxu0 0.0
    %915 = vmatprep.subr.mxu0 0.0
    %916 = vmatpush1.msra.mxu0 0.0
    %917 = vmatprep.subr.mxu0 0.0
    %918 = vmatpush1.msra.mxu0 0.0
    %919 = vmatprep.subr.mxu0 0.0
    %920 = vmatpush1.msra.mxu0 0.0
    %921 = vmatprep.subr.mxu0 0.0
    %922 = vmatpush1.msra.mxu0 0.0
    %923 = vmatprep.subr.mxu0 0.0
    %924 = vmatpush1.msra.mxu0 0.0
    %925 = vmatprep.subr.mxu0 0.0
    %926 = vmatpush1.msra.mxu0 0.0
    %927 = vmatprep.subr.mxu0 0.0
    %928 = vmatpush1.msra.mxu0 0.0
    %929 = vmatprep.subr.mxu0 0.0
    %930 = vmatpush1.msra.mxu0 0.0
    %931 = vmatprep.subr.mxu0 0.0
    %932 = vmatpush1.msra.mxu0 0.0
    %933 = vmatprep.mubr.f32.mxu0 0.0
    %934 = vmatmul.mubr.f32.gmra.mrb[0].mxu0 %v862
    %v935 = vpop.f32.mrb[0].mxu0
    %v936 = vadd.f32 %v867, %v935
    %v937 = vpop.f32.mrb[0].mxu0
    %938 = vdwg.mxu0
    %v939 = vmax.f32 %v936, 0.0
    %v941 = vlaneseq
    %v942 = vshrl.u32 %v941, 7
    %v943 = vsub.s32 0, %v942
    %v944 = vrot.slane %v281, %v943
    %946 = vmatprep.subr.mxu0 0.0
    %947 = vmatpush1.msra.mxu0 %v247
    %948 = vmatprep.subr.mxu0 0.0
    %949 = vmatpush1.msra.mxu0 %v248
    %950 = vmatprep.subr.mxu0 0.0
    %951 = vmatpush1.msra.mxu0 %v249
    %952 = vmatprep.subr.mxu0 0.0
    %953 = vmatpush1.msra.mxu0 %v250
    %954 = vmatprep.subr.mxu0 0.0
    %955 = vmatpush1.msra.mxu0 %v251
    %956 = vmatprep.subr.mxu0 0.0
    %957 = vmatpush1.msra.mxu0 %v252
    %958 = vmatprep.subr.mxu0 0.0
    %959 = vmatpush1.msra.mxu0 %v253
    %960 = vmatprep.subr.mxu0 0.0
    %961 = vmatpush1.msra.mxu0 %v254
    %962 = vmatprep.subr.mxu0 0.0
    %963 = vmatpush1.msra.mxu0 %v255
    %964 = vmatprep.subr.mxu0 0.0
    %965 = vmatpush1.msra.mxu0 %v256
    %966 = vmatprep.subr.mxu0 0.0
    %967 = vmatpush1.msra.mxu0 %v257
    %968 = vmatprep.subr.mxu0 0.0
    %969 = vmatpush1.msra.mxu0 %v258
    %970 = vmatprep.subr.mxu0 0.0
    %971 = vmatpush1.msra.mxu0 %v259
    %972 = vmatprep.subr.mxu0 0.0
    %973 = vmatpush1.msra.mxu0 %v260
    %974 = vmatprep.subr.mxu0 0.0
    %975 = vmatpush1.msra.mxu0 %v261
    %976 = vmatprep.subr.mxu0 0.0
    %977 = vmatpush1.msra.mxu0 %v262
    %978 = vmatprep.subr.mxu0 0.0
    %979 = vmatpush1.msra.mxu0 0.0
    %980 = vmatprep.subr.mxu0 0.0
    %981 = vmatpush1.msra.mxu0 0.0
    %982 = vmatprep.subr.mxu0 0.0
    %983 = vmatpush1.msra.mxu0 0.0
    %984 = vmatprep.subr.mxu0 0.0
    %985 = vmatpush1.msra.mxu0 0.0
    %986 = vmatprep.subr.mxu0 0.0
    %987 = vmatpush1.msra.mxu0 0.0
    %988 = vmatprep.subr.mxu0 0.0
    %989 = vmatpush1.msra.mxu0 0.0
    %990 = vmatprep.subr.mxu0 0.0
    %991 = vmatpush1.msra.mxu0 0.0
    %992 = vmatprep.subr.mxu0 0.0
    %993 = vmatpush1.msra.mxu0 0.0
    %994 = vmatprep.subr.mxu0 0.0
    %995 = vmatpush1.msra.mxu0 0.0
    %996 = vmatprep.subr.mxu0 0.0
    %997 = vmatpush1.msra.mxu0 0.0
    %998 = vmatprep.subr.mxu0 0.0
    %999 = vmatpush1.msra.mxu0 0.0
    %1000 = vmatprep.subr.mxu0 0.0
    %1001 = vmatpush1.msra.mxu0 0.0
    %1002 = vmatprep.subr.mxu0 0.0
    %1003 = vmatpush1.msra.mxu0 0.0
    %1004 = vmatprep.subr.mxu0 0.0
    %1005 = vmatpush1.msra.mxu0 0.0
    %1006 = vmatprep.subr.mxu0 0.0
    %1007 = vmatpush1.msra.mxu0 0.0
    %1008 = vmatprep.subr.mxu0 0.0
    %1009 = vmatpush1.msra.mxu0 0.0
    %1010 = vmatprep.mubr.f32.mxu0 0.0
    %1011 = vmatmul.mubr.f32.gmra.mrb[0].mxu0 %v939
    %v1012 = vpop.f32.mrb[0].mxu0
    %v1013 = vadd.f32 %v944, %v1012
    %v1014 = vpop.f32.mrb[0].mxu0
    %1015 = vdwg.mxu0
    %v1016 = vmax.f32 %v1013, 0.0
    %v1018 = vlaneseq
    %v1019 = vshrl.u32 %v1018, 7
    %v1020 = vsub.s32 0, %v1019
    %v1021 = vrot.slane %v282, %v1020
    %1023 = vmatprep.subr.mxu0 0.0
    %1024 = vmatpush1.msra.mxu0 %v263
    %1025 = vmatprep.subr.mxu0 0.0
    %1026 = vmatpush1.msra.mxu0 %v264
    %1027 = vmatprep.subr.mxu0 0.0
    %1028 = vmatpush1.msra.mxu0 %v265
    %1029 = vmatprep.subr.mxu0 0.0
    %1030 = vmatpush1.msra.mxu0 %v266
    %1031 = vmatprep.subr.mxu0 0.0
    %1032 = vmatpush1.msra.mxu0 %v267
    %1033 = vmatprep.subr.mxu0 0.0
    %1034 = vmatpush1.msra.mxu0 %v268
    %1035 = vmatprep.subr.mxu0 0.0
    %1036 = vmatpush1.msra.mxu0 %v269
    %1037 = vmatprep.subr.mxu0 0.0
    %1038 = vmatpush1.msra.mxu0 %v270
    %1039 = vmatprep.subr.mxu0 0.0
    %1040 = vmatpush1.msra.mxu0 %v271
    %1041 = vmatprep.subr.mxu0 0.0
    %1042 = vmatpush1.msra.mxu0 %v272
    %1043 = vmatprep.subr.mxu0 0.0
    %1044 = vmatpush1.msra.mxu0 %v273
    %1045 = vmatprep.subr.mxu0 0.0
    %1046 = vmatpush1.msra.mxu0 %v274
    %1047 = vmatprep.subr.mxu0 0.0
    %1048 = vmatpush1.msra.mxu0 %v275
    %1049 = vmatprep.subr.mxu0 0.0
    %1050 = vmatpush1.msra.mxu0 %v276
    %1051 = vmatprep.subr.mxu0 0.0
    %1052 = vmatpush1.msra.mxu0 %v277
    %1053 = vmatprep.subr.mxu0 0.0
    %1054 = vmatpush1.msra.mxu0 %v278
    %1055 = vmatprep.subr.mxu0 0.0
    %1056 = vmatpush1.msra.mxu0 0.0
    %1057 = vmatprep.subr.mxu0 0.0
    %1058 = vmatpush1.msra.mxu0 0.0
    %1059 = vmatprep.subr.mxu0 0.0
    %1060 = vmatpush1.msra.mxu0 0.0
    %1061 = vmatprep.subr.mxu0 0.0
    %1062 = vmatpush1.msra.mxu0 0.0
    %1063 = vmatprep.subr.mxu0 0.0
    %1064 = vmatpush1.msra.mxu0 0.0
    %1065 = vmatprep.subr.mxu0 0.0
    %1066 = vmatpush1.msra.mxu0 0.0
    %1067 = vmatprep.subr.mxu0 0.0
    %1068 = vmatpush1.msra.mxu0 0.0
    %1069 = vmatprep.subr.mxu0 0.0
    %1070 = vmatpush1.msra.mxu0 0.0
    %1071 = vmatprep.subr.mxu0 0.0
    %1072 = vmatpush1.msra.mxu0 0.0
    %1073 = vmatprep.subr.mxu0 0.0
    %1074 = vmatpush1.msra.mxu0 0.0
    %1075 = vmatprep.subr.mxu0 0.0
    %1076 = vmatpush1.msra.mxu0 0.0
    %1077 = vmatprep.subr.mxu0 0.0
    %1078 = vmatpush1.msra.mxu0 0.0
    %1079 = vmatprep.subr.mxu0 0.0
    %1080 = vmatpush1.msra.mxu0 0.0
    %1081 = vmatprep.subr.mxu0 0.0
    %1082 = vmatpush1.msra.mxu0 0.0
    %1083 = vmatprep.subr.mxu0 0.0
    %1084 = vmatpush1.msra.mxu0 0.0
    %1085 = vmatprep.subr.mxu0 0.0
    %1086 = vmatpush1.msra.mxu0 0.0
    %1087 = vmatprep.mubr.f32.mxu0 0.0
    %1088 = vmatmul.mubr.f32.gmra.mrb[0].mxu0 %v1016
    %v1089 = vpop.f32.mrb[0].mxu0
    %v1090 = vadd.f32 %v1021, %v1089
    %v1091 = vpop.f32.mrb[0].mxu0
    %1092 = vdwg.mxu0
    %v1093 = vmax.f32 %v1090, 0.0
    %v1095 = vlaneseq
    %v1096 = vshrl.u32 %v1095, 7
    %v1097 = vsub.s32 0, %v1096
    %v1098 = vrot.slane %v283, %v1097
    %v1100 = vmul.f32 %v1093, %v1098
    %v1102 = vlaneseq
    %v1103 = vshrl.u32 %v1102, 7
    %v1104 = vsub.s32 0, %v1103
    %v1105 = vrot.slane %v284, %v1104
    %v1107 = vadd.f32 %v1100, %v1105
    %1108 = vst [vmem:[#allocation11] sm:$0x3] %v1107
    // Predicated region
    $region82: #{attention_block_forward.1} parent=1 // pred_check
      _
    $region83: #{attention_block_forward.1} parent=1 // pred_check_branch
      %1110 = sbr.rel (0) target = $region85
    $region84: #{attention_block_forward.1} parent=1 // pred_region
      %s1112 = ssub.s32 32, 32
      %1113 = vsyncadd [#allocation4], %s1112
      %s1115 = sshll.u32 [#allocation11], 4
      %s1116 = int_to_ptr.vmem [resolvable:$true] %s1115
      %1118 = dma.vmem_to_hbm [thread:$0]  %s1116, 32, %s15, [#allocation4]
    $region85: #{attention_block_forward.1} parent=1 // pred_fallthru
      _
    // Predicated region
    $region86: #{attention_block_forward.1} parent=1 // pred_check
      _
    $region87: #{attention_block_forward.1} parent=1 // pred_check_branch
      %1120 = sbr.rel (0) target = $region89
    $region88: #{attention_block_forward.1} parent=1 // pred_region
      %1121 = dma.done [#allocation4], 32
    $region89: #{attention_block_forward.1} parent=1 // pred_fallthru
      _
    %1122 = vsyncpa [#allocation3], 1
    %1123 = vsyncpa [#allocation6], 1
    %1124 = vsyncpa [#allocation9], 1
    %1125 = vsyncpa [#allocation4], 1

</llo_original>
